<compile_context>
chip_gen: v6e
topology: v6e:2x2x1
jax: 0.10.0
libtpu: 0.0.40
codegen_flags: <defaults>
</compile_context>

<pallas_src>
import functools
import math

import jax
import jax.numpy as jnp
import numpy as np
from jax.experimental import pallas as pl
from jax.experimental.pallas import tpu as pltpu


def gattnet_kernel(vq_ref, vkv_ref, cond_ref, vbias_ref,
                   w_self_ref, b_self_ref,
                   wq_ref, bq_ref, wk_ref, bk_ref, wc_ref, bc_ref,
                   out_ref, *, num_heads, dir_num):
    d_out = w_self_ref.shape[1]
    dg = d_out // num_heads
    scale = 1.0 / math.sqrt(float(dg))

    b_self = b_self_ref[...]                                   # [1, D] f32

    # self_weights: Linear(Din, Dout) (FCNet act='' -> plain linear).
    # bf16 MXU operands, f32 accumulation.
    self_q = jnp.dot(vq_ref[0], w_self_ref[...],
                     preferred_element_type=jnp.float32) + b_self    # [tn, D]
    self_kv = jnp.dot(vkv_ref[0], w_self_ref[...],
                      preferred_element_type=jnp.float32) + b_self   # [ng, D]

    self_q16 = self_q.astype(jnp.bfloat16)
    self_kv16 = self_kv.astype(jnp.bfloat16)

    # Small per-direction bias rows (tiny; full load is fine).
    bq = bq_ref[...]
    bk = bk_ref[...]
    bc = bc_ref[...]

    # Register (vreg) accumulator: residual + per-direction attention outputs.
    acc = self_q                                               # [tn, D] f32

    for d in range(dir_num):
        cond = cond_ref[0, d]                                  # [tn, ng] f32
        vbias = vbias_ref[0, d]                                # [tn, ng] f32
        edge_mask = cond > 0.0

        # Lazy per-direction weight loads (wq_ref[d] etc., static d).
        q = jnp.dot(self_q16, wq_ref[d],
                    preferred_element_type=jnp.float32) + bq[d:d + 1, :]
        k = jnp.dot(self_kv16, wk_ref[d],
                    preferred_element_type=jnp.float32) + bk[d:d + 1, :]
        # Grouped 1x1 conv folded into V (exact algebra).
        vw = jnp.dot(self_kv16, wc_ref[d],
                     preferred_element_type=jnp.float32)              # [ng, D]

        q16 = (q * scale).astype(jnp.bfloat16)
        k16 = k.astype(jnp.bfloat16)
        vw16 = vw.astype(jnp.bfloat16)

        head_outs = []
        for h in range(num_heads):
            lo, hi = h * dg, (h + 1) * dg
            aff = jax.lax.dot_general(
                q16[:, lo:hi], k16[:, lo:hi], (((1,), (1,)), ((), ())),
                preferred_element_type=jnp.float32)                   # [tn, ng]
            masked = jnp.where(edge_mask, aff, -9e15) + vbias
            m = jnp.max(masked, axis=-1, keepdims=True)
            e = jnp.exp(masked - m)
            p = e * pl.reciprocal(jnp.sum(e, axis=-1, keepdims=True),
                                  approx=True)                        # softmax
            y_h = jnp.dot(p.astype(jnp.bfloat16), vw16[:, lo:hi],
                          preferred_element_type=jnp.float32)         # [tn, dg]
            head_outs.append(y_h)
        acc = acc + jnp.concatenate(head_outs, axis=-1)               # [tn, D]

    # Per-direction output biases collapsed into a single add.
    acc = acc + jnp.sum(bc[:dir_num], axis=0, keepdims=True)

    # Final dropout = identity (inference), then ReLU; single full-width store.
    out_ref[0] = jnp.maximum(acc, 0.0)


def _pick_row_tile(n):
    if n <= 128:
        return n
    for cand in (128, 64, 32, 16, 8):
        if n % cand == 0:
            return cand
    return n


def gattnet_forward(v_feat, adj, params, *, num_heads, nongt_dim, dir_num):
    B, N, Din = v_feat.shape
    D = params['w_self'].shape[1]
    nongt = min(nongt_dim, N)
    nongt_pad = ((nongt + 7) // 8) * 8

    adj = adj.astype(jnp.float32)
    w_b = params['w_bias'][0]                 # [L]
    b_b = params['b_bias'][0, 0]              # scalar

    # ---- Wrapper-side precompute: adj never enters the kernel. ----
    conds, vbs = [], []
    for d in range(dir_num):
        if d == 0:
            a = adj[:, :, :nongt, :]                               # [B, N, ng, L]
            c = jnp.sum(a, axis=-1)                                # [B, N, ng]
            vb = jnp.einsum('bnml,l->bnm', a, w_b) + b_b
        else:
            # direction 1 uses adj.transpose(1, 2)[:, :, :nongt]; compute it as
            # a reduce of adj[:, :nongt] (no full-tensor transpose materialized)
            a = adj[:, :nongt, :, :]                               # [B, ng, N, L]
            c = jnp.einsum('bmnl->bnm', a)
            vb = jnp.einsum('bmnl,l->bnm', a, w_b) + b_b
        conds.append(c)
        vbs.append(vb)
    cond = jnp.stack(conds, axis=1)                                # [B, dir, N, ng]
    vbias = jnp.stack(vbs, axis=1)

    if nongt_pad > nongt:
        pad_cfg = ((0, 0), (0, 0), (0, 0), (0, nongt_pad - nongt))
        cond = jnp.pad(cond, pad_cfg)                              # pad cond = 0
        vbias = jnp.pad(vbias, pad_cfg, constant_values=-9e15)     # fully masked

    v_kv = v_feat[:, :nongt, :]
    if nongt_pad > nongt:
        v_kv = jnp.pad(v_kv, ((0, 0), (0, nongt_pad - nongt), (0, 0)))

    # bf16 MXU operands (f32 accumulation happens in-kernel).
    v_q16 = v_feat.astype(jnp.bfloat16)
    v_kv16 = v_kv.astype(jnp.bfloat16)
    w_self16 = params['w_self'].astype(jnp.bfloat16)
    wq16 = params['wq'].astype(jnp.bfloat16)
    wk16 = params['wk'].astype(jnp.bfloat16)
    wc16 = params['wc_t'].astype(jnp.bfloat16)

    tn = _pick_row_tile(N)
    n_tiles = N // tn

    kernel = functools.partial(gattnet_kernel, num_heads=num_heads,
                               dir_num=dir_num)

    def const_spec(shape):
        nd = len(shape)
        return pl.BlockSpec(shape, lambda b, t, _nd=nd: (0,) * _nd)

    grid_spec = pltpu.PrefetchScalarGridSpec(
        num_scalar_prefetch=0,
        grid=(B, n_tiles),
        in_specs=[
            pl.BlockSpec((1, tn, Din), lambda b, t: (b, t, 0)),
            pl.BlockSpec((1, nongt_pad, Din), lambda b, t: (b, 0, 0)),
            pl.BlockSpec((1, dir_num, tn, nongt_pad), lambda b, t: (b, 0, t, 0)),
            pl.BlockSpec((1, dir_num, tn, nongt_pad), lambda b, t: (b, 0, t, 0)),
            const_spec(w_self16.shape),
            const_spec(params['b_self'].shape),
            const_spec(wq16.shape),
            const_spec(params['bq'].shape),
            const_spec(wk16.shape),
            const_spec(params['bk'].shape),
            const_spec(wc16.shape),
            const_spec(params['bc'].shape),
        ],
        out_specs=pl.BlockSpec((1, tn, D), lambda b, t: (b, t, 0)),
    )
    return pl.pallas_call(
        kernel,
        out_shape=jax.ShapeDtypeStruct((B, N, D), jnp.float32),
        grid_spec=grid_spec,
        compiler_params=pltpu.CompilerParams(
            dimension_semantics=("parallel", "parallel"),
            vmem_limit_bytes=64 * 1024 * 1024),
    )(v_q16, v_kv16, cond, vbias,
      w_self16, params['b_self'],
      wq16, params['bq'],
      wk16, params['bk'],
      wc16, params['bc'])


def gattnet_reference(v_feat, adj, params, *, num_heads, nongt_dim, dir_num):
    """Pure-JAX (f32) mirror of the PyTorch forward (eval mode)."""
    B, N, _ = v_feat.shape
    D = params['w_self'].shape[1]
    dg = D // num_heads
    nongt = min(nongt_dim, N)
    adj = adj.astype(jnp.float32)

    self_feat = v_feat @ params['w_self'] + params['b_self']          # [B,N,D]
    output = self_feat
    adj_list = [adj, jnp.swapaxes(adj, 1, 2)]
    for d in range(dir_num):
        a = adj_list[d][:, :, :nongt, :]                              # [B,N,ng,L]
        cond = a.sum(-1)                                              # [B,N,ng]
        vbias = (a * params['w_bias'][0][None, None, None, :]).sum(-1) \
            + params['b_bias'][0, 0]
        q = self_feat @ params['wq'][d] + params['bq'][d]
        k = self_feat[:, :nongt, :] @ params['wk'][d] + params['bk'][d]
        vdat = self_feat[:, :nongt, :]
        qh = q.reshape(B, N, num_heads, dg).transpose(0, 2, 1, 3)
        kh = k.reshape(B, nongt, num_heads, dg).transpose(0, 2, 1, 3)
        aff = jnp.einsum('bhnd,bhmd->bhnm', qh, kh) / math.sqrt(dg)
        aff = aff.transpose(0, 2, 1, 3)                               # [B,N,H,ng]
        masked = jnp.where(cond[:, :, None, :] > 0, aff, -9e15) \
            + vbias[:, :, None, :]
        p = jax.nn.softmax(masked, axis=-1)
        out_h = jnp.einsum('bnhm,bmd->bnhd', p, vdat)                 # [B,N,H,D]
        wct = params['wc_t'][d].reshape(D, num_heads, dg)
        y = jnp.einsum('bnhd,dhg->bnhg', out_h, wct).reshape(B, N, D) \
            + params['bc'][d]
        output = output + y
    return jax.nn.relu(output)


if __name__ == "__main__":
    B, N = 2, 8              # batch_size, num_rois
    DIN, DOUT = 32, 32       # in_feat_dim, out_feat_dim
    L = 4                    # label_num
    NUM_HEADS = 4
    NONGT_DIM = 20           # effective nongt = min(20, N) = N
    DIR_NUM = 2

    key = jax.random.PRNGKey(0)
    keys = jax.random.split(key, 12)

    def nrm(k, shape, s=0.1):
        return (s * jax.random.normal(k, shape)).astype(jnp.float32)

    params = {
        'w_self': nrm(keys[0], (DIN, DOUT)),          # self_weights Linear
        'b_self': nrm(keys[1], (1, DOUT)),
        'w_bias': nrm(keys[2], (1, L)),               # bias FCNet Linear(L, 1)
        'b_bias': nrm(keys[3], (1, 1)),
        'wq':   nrm(keys[4], (DIR_NUM, DOUT, DOUT)),  # per-direction query Linear
        'bq':   nrm(keys[5], (DIR_NUM, DOUT)),
        'wk':   nrm(keys[6], (DIR_NUM, DOUT, DOUT)),  # per-direction key Linear
        'bk':   nrm(keys[7], (DIR_NUM, DOUT)),
        'wc_t': nrm(keys[8], (DIR_NUM, DOUT, DOUT)),  # grouped 1x1 conv, transposed
        'bc':   nrm(keys[9], (DIR_NUM, DOUT)),
    }

    v_feat = jax.random.normal(keys[10], (B, N, DIN), dtype=jnp.float32)
    adj = (jax.random.uniform(keys[11], (B, N, N, L)) < 0.5).astype(jnp.float32)

    fwd = jax.jit(functools.partial(gattnet_forward, num_heads=NUM_HEADS,
                                    nongt_dim=NONGT_DIM, dir_num=DIR_NUM))
    out = fwd(v_feat, adj, params)
    out = jax.block_until_ready(out)

    ref = gattnet_reference(v_feat, adj, params, num_heads=NUM_HEADS,
                            nongt_dim=NONGT_DIM, dir_num=DIR_NUM)
    np.testing.assert_allclose(np.asarray(out), np.asarray(ref),
                               rtol=2e-2, atol=2e-2)
    print("KERNEL_OK")
</pallas_src>

<mosaic_0001>
module attributes {stable_mosaic.version = 11 : i64} {
  func.func @gattnet_kernel(%arg0: i32, %arg1: i32, %arg2: memref<1x8x32xbf16, #tpu.memory_space<vmem>>, %arg3: memref<1x8x32xbf16, #tpu.memory_space<vmem>>, %arg4: memref<1x2x8x8xf32, #tpu.memory_space<vmem>>, %arg5: memref<1x2x8x8xf32, #tpu.memory_space<vmem>>, %arg6: memref<32x32xbf16, #tpu.memory_space<vmem>>, %arg7: memref<1x32xf32, #tpu.memory_space<vmem>>, %arg8: memref<2x32x32xbf16, #tpu.memory_space<vmem>>, %arg9: memref<2x32xf32, #tpu.memory_space<vmem>>, %arg10: memref<2x32x32xbf16, #tpu.memory_space<vmem>>, %arg11: memref<2x32xf32, #tpu.memory_space<vmem>>, %arg12: memref<2x32x32xbf16, #tpu.memory_space<vmem>>, %arg13: memref<2x32xf32, #tpu.memory_space<vmem>>, %arg14: memref<1x8x32xf32, #tpu.memory_space<vmem>>) attributes {dimension_semantics = [#tpu.dimension_semantics<parallel>, #tpu.dimension_semantics<parallel>], iteration_bounds = array<i64: 2, 1>, scalar_prefetch = 0 : i64, scratch_operands = 0 : i64, tpu.core_type = #tpu.core_type<tc>, window_params = [{transform_indices = @transform_0, window_bounds = array<i64: 1, 8, 32>}, {transform_indices = @transform_1, window_bounds = array<i64: 1, 8, 32>}, {transform_indices = @transform_2, window_bounds = array<i64: 1, 2, 8, 8>}, {transform_indices = @transform_3, window_bounds = array<i64: 1, 2, 8, 8>}, {pipeline_mode = #tpu.pipeline_mode<synchronous>, transform_indices = @transform_4, window_bounds = array<i64: 32, 32>}, {pipeline_mode = #tpu.pipeline_mode<synchronous>, transform_indices = @transform_5, window_bounds = array<i64: 1, 32>}, {pipeline_mode = #tpu.pipeline_mode<synchronous>, transform_indices = @transform_6, window_bounds = array<i64: 2, 32, 32>}, {pipeline_mode = #tpu.pipeline_mode<synchronous>, transform_indices = @transform_7, window_bounds = array<i64: 2, 32>}, {pipeline_mode = #tpu.pipeline_mode<synchronous>, transform_indices = @transform_8, window_bounds = array<i64: 2, 32, 32>}, {pipeline_mode = #tpu.pipeline_mode<synchronous>, transform_indices = @transform_9, window_bounds = array<i64: 2, 32>}, {pipeline_mode = #tpu.pipeline_mode<synchronous>, transform_indices = @transform_10, window_bounds = array<i64: 2, 32, 32>}, {pipeline_mode = #tpu.pipeline_mode<synchronous>, transform_indices = @transform_11, window_bounds = array<i64: 2, 32>}, {transform_indices = @transform_12, window_bounds = array<i64: 1, 8, 32>}]} {
    %c0 = arith.constant 0 : index
    %c0_0 = arith.constant 0 : index
    %0 = vector.load %arg7[%c0, %c0_0] : memref<1x32xf32, #tpu.memory_space<vmem>>, vector<1x32xf32>
    %c0_1 = arith.constant 0 : index
    %c0_2 = arith.constant 0 : index
    %c0_3 = arith.constant 0 : index
    %1 = vector.load %arg2[%c0_1, %c0_2, %c0_3] : memref<1x8x32xbf16, #tpu.memory_space<vmem>>, vector<1x8x32xbf16>
    %2 = vector.shape_cast %1 : vector<1x8x32xbf16> to vector<8x32xbf16>
    %c0_4 = arith.constant 0 : index
    %c0_5 = arith.constant 0 : index
    %3 = vector.load %arg6[%c0_4, %c0_5] : memref<32x32xbf16, #tpu.memory_space<vmem>>, vector<32x32xbf16>
    %cst = arith.constant dense<0.000000e+00> : vector<8x32xf32>
    %4 = tpu.matmul %2, %3, %cst {dimension_numbers = #tpu.dot_dimension_numbers<[1], [0], [0], [1], [0, 0, 1, 1], [], []>} : vector<8x32xbf16>, vector<32x32xbf16>, vector<8x32xf32> -> vector<8x32xf32>
    %5 = vector.broadcast %0 : vector<1x32xf32> to vector<8x32xf32>
    %6 = arith.addf %4, %5 : vector<8x32xf32>
    %c0_6 = arith.constant 0 : index
    %c0_7 = arith.constant 0 : index
    %c0_8 = arith.constant 0 : index
    %7 = vector.load %arg3[%c0_6, %c0_7, %c0_8] : memref<1x8x32xbf16, #tpu.memory_space<vmem>>, vector<1x8x32xbf16>
    %8 = vector.shape_cast %7 : vector<1x8x32xbf16> to vector<8x32xbf16>
    %c0_9 = arith.constant 0 : index
    %c0_10 = arith.constant 0 : index
    %9 = vector.load %arg6[%c0_9, %c0_10] : memref<32x32xbf16, #tpu.memory_space<vmem>>, vector<32x32xbf16>
    %cst_11 = arith.constant dense<0.000000e+00> : vector<8x32xf32>
    %10 = tpu.matmul %8, %9, %cst_11 {dimension_numbers = #tpu.dot_dimension_numbers<[1], [0], [0], [1], [0, 0, 1, 1], [], []>} : vector<8x32xbf16>, vector<32x32xbf16>, vector<8x32xf32> -> vector<8x32xf32>
    %11 = vector.broadcast %0 : vector<1x32xf32> to vector<8x32xf32>
    %12 = arith.addf %10, %11 : vector<8x32xf32>
    %13 = arith.truncf %6 : vector<8x32xf32> to vector<8x32xbf16>
    %14 = arith.truncf %12 : vector<8x32xf32> to vector<8x32xbf16>
    %c0_12 = arith.constant 0 : index
    %c0_13 = arith.constant 0 : index
    %15 = vector.load %arg9[%c0_12, %c0_13] : memref<2x32xf32, #tpu.memory_space<vmem>>, vector<2x32xf32>
    %c0_14 = arith.constant 0 : index
    %c0_15 = arith.constant 0 : index
    %16 = vector.load %arg11[%c0_14, %c0_15] : memref<2x32xf32, #tpu.memory_space<vmem>>, vector<2x32xf32>
    %c0_16 = arith.constant 0 : index
    %c0_17 = arith.constant 0 : index
    %17 = vector.load %arg13[%c0_16, %c0_17] : memref<2x32xf32, #tpu.memory_space<vmem>>, vector<2x32xf32>
    %c0_18 = arith.constant 0 : index
    %c0_19 = arith.constant 0 : index
    %c0_20 = arith.constant 0 : index
    %c0_21 = arith.constant 0 : index
    %18 = vector.load %arg4[%c0_18, %c0_19, %c0_20, %c0_21] : memref<1x2x8x8xf32, #tpu.memory_space<vmem>>, vector<1x1x8x8xf32>
    %19 = vector.shape_cast %18 : vector<1x1x8x8xf32> to vector<8x8xf32>
    %c0_22 = arith.constant 0 : index
    %c0_23 = arith.constant 0 : index
    %c0_24 = arith.constant 0 : index
    %c0_25 = arith.constant 0 : index
    %20 = vector.load %arg5[%c0_22, %c0_23, %c0_24, %c0_25] : memref<1x2x8x8xf32, #tpu.memory_space<vmem>>, vector<1x1x8x8xf32>
    %21 = vector.shape_cast %20 : vector<1x1x8x8xf32> to vector<8x8xf32>
    %cst_26 = arith.constant 0.000000e+00 : f32
    %22 = vector.broadcast %cst_26 : f32 to vector<8x8xf32>
    %23 = arith.cmpf ogt, %19, %22 : vector<8x8xf32>
    %c0_27 = arith.constant 0 : index
    %c0_28 = arith.constant 0 : index
    %c0_29 = arith.constant 0 : index
    %24 = vector.load %arg8[%c0_27, %c0_28, %c0_29] : memref<2x32x32xbf16, #tpu.memory_space<vmem>>, vector<1x32x32xbf16>
    %25 = vector.shape_cast %24 : vector<1x32x32xbf16> to vector<32x32xbf16>
    %cst_30 = arith.constant dense<0.000000e+00> : vector<8x32xf32>
    %26 = tpu.matmul %13, %25, %cst_30 {dimension_numbers = #tpu.dot_dimension_numbers<[1], [0], [0], [1], [0, 0, 1, 1], [], []>} : vector<8x32xbf16>, vector<32x32xbf16>, vector<8x32xf32> -> vector<8x32xf32>
    %27 = vector.extract_strided_slice %15 {offsets = [0, 0], sizes = [1, 32], strides = [1, 1]} : vector<2x32xf32> to vector<1x32xf32>
    %28 = vector.broadcast %27 : vector<1x32xf32> to vector<8x32xf32>
    %29 = arith.addf %26, %28 : vector<8x32xf32>
    %c0_31 = arith.constant 0 : index
    %c0_32 = arith.constant 0 : index
    %c0_33 = arith.constant 0 : index
    %30 = vector.load %arg10[%c0_31, %c0_32, %c0_33] : memref<2x32x32xbf16, #tpu.memory_space<vmem>>, vector<1x32x32xbf16>
    %31 = vector.shape_cast %30 : vector<1x32x32xbf16> to vector<32x32xbf16>
    %cst_34 = arith.constant dense<0.000000e+00> : vector<8x32xf32>
    %32 = tpu.matmul %14, %31, %cst_34 {dimension_numbers = #tpu.dot_dimension_numbers<[1], [0], [0], [1], [0, 0, 1, 1], [], []>} : vector<8x32xbf16>, vector<32x32xbf16>, vector<8x32xf32> -> vector<8x32xf32>
    %33 = vector.extract_strided_slice %16 {offsets = [0, 0], sizes = [1, 32], strides = [1, 1]} : vector<2x32xf32> to vector<1x32xf32>
    %34 = vector.broadcast %33 : vector<1x32xf32> to vector<8x32xf32>
    %35 = arith.addf %32, %34 : vector<8x32xf32>
    %c0_35 = arith.constant 0 : index
    %c0_36 = arith.constant 0 : index
    %c0_37 = arith.constant 0 : index
    %36 = vector.load %arg12[%c0_35, %c0_36, %c0_37] : memref<2x32x32xbf16, #tpu.memory_space<vmem>>, vector<1x32x32xbf16>
    %37 = vector.shape_cast %36 : vector<1x32x32xbf16> to vector<32x32xbf16>
    %cst_38 = arith.constant dense<0.000000e+00> : vector<8x32xf32>
    %38 = tpu.matmul %14, %37, %cst_38 {dimension_numbers = #tpu.dot_dimension_numbers<[1], [0], [0], [1], [0, 0, 1, 1], [], []>} : vector<8x32xbf16>, vector<32x32xbf16>, vector<8x32xf32> -> vector<8x32xf32>
    %cst_39 = arith.constant 0.353553385 : f32
    %39 = vector.broadcast %cst_39 : f32 to vector<8x32xf32>
    %40 = arith.mulf %29, %39 : vector<8x32xf32>
    %41 = arith.truncf %40 : vector<8x32xf32> to vector<8x32xbf16>
    %42 = arith.truncf %35 : vector<8x32xf32> to vector<8x32xbf16>
    %43 = arith.truncf %38 : vector<8x32xf32> to vector<8x32xbf16>
    %44 = vector.extract_strided_slice %41 {offsets = [0, 0], sizes = [8, 8], strides = [1, 1]} : vector<8x32xbf16> to vector<8x8xbf16>
    %45 = vector.extract_strided_slice %42 {offsets = [0, 0], sizes = [8, 8], strides = [1, 1]} : vector<8x32xbf16> to vector<8x8xbf16>
    %cst_40 = arith.constant dense<0.000000e+00> : vector<8x8xf32>
    %46 = tpu.matmul %44, %45, %cst_40 {dimension_numbers = #tpu.dot_dimension_numbers<[1], [1], [0], [0], [0, 0, 1, 0], [], []>} : vector<8x8xbf16>, vector<8x8xbf16>, vector<8x8xf32> -> vector<8x8xf32>
    %cst_41 = arith.constant -9.000000e+15 : f32
    %47 = vector.broadcast %cst_41 : f32 to vector<8x8xf32>
    %48 = arith.select %23, %46, %47 : vector<8x8xi1>, vector<8x8xf32>
    %49 = arith.addf %48, %21 : vector<8x8xf32>
    %cst_42 = arith.constant dense<0xFF800000> : vector<8xf32>
    %50 = vector.multi_reduction <maximumf>, %49, %cst_42 [1] : vector<8x8xf32> to vector<8xf32>
    %51 = vector.shape_cast %50 : vector<8xf32> to vector<8x1xf32>
    %52 = vector.broadcast %51 : vector<8x1xf32> to vector<8x8xf32>
    %53 = arith.subf %49, %52 : vector<8x8xf32>
    %54 = math.exp %53 : vector<8x8xf32>
    %cst_43 = arith.constant dense<0.000000e+00> : vector<8xf32>
    %55 = vector.multi_reduction <add>, %54, %cst_43 [1] : vector<8x8xf32> to vector<8xf32>
    %56 = vector.shape_cast %55 : vector<8xf32> to vector<8x1xf32>
    %57 = tpu.reciprocal %56 {approx = true} : vector<8x1xf32> -> vector<8x1xf32>
    %58 = vector.broadcast %57 : vector<8x1xf32> to vector<8x8xf32>
    %59 = arith.mulf %54, %58 : vector<8x8xf32>
    %60 = arith.truncf %59 : vector<8x8xf32> to vector<8x8xbf16>
    %61 = vector.extract_strided_slice %43 {offsets = [0, 0], sizes = [8, 8], strides = [1, 1]} : vector<8x32xbf16> to vector<8x8xbf16>
    %cst_44 = arith.constant dense<0.000000e+00> : vector<8x8xf32>
    %62 = tpu.matmul %60, %61, %cst_44 {dimension_numbers = #tpu.dot_dimension_numbers<[1], [0], [0], [1], [0, 0, 1, 1], [], []>} : vector<8x8xbf16>, vector<8x8xbf16>, vector<8x8xf32> -> vector<8x8xf32>
    %63 = vector.extract_strided_slice %41 {offsets = [0, 8], sizes = [8, 8], strides = [1, 1]} : vector<8x32xbf16> to vector<8x8xbf16>
    %64 = vector.extract_strided_slice %42 {offsets = [0, 8], sizes = [8, 8], strides = [1, 1]} : vector<8x32xbf16> to vector<8x8xbf16>
    %cst_45 = arith.constant dense<0.000000e+00> : vector<8x8xf32>
    %65 = tpu.matmul %63, %64, %cst_45 {dimension_numbers = #tpu.dot_dimension_numbers<[1], [1], [0], [0], [0, 0, 1, 0], [], []>} : vector<8x8xbf16>, vector<8x8xbf16>, vector<8x8xf32> -> vector<8x8xf32>
    %cst_46 = arith.constant -9.000000e+15 : f32
    %66 = vector.broadcast %cst_46 : f32 to vector<8x8xf32>
    %67 = arith.select %23, %65, %66 : vector<8x8xi1>, vector<8x8xf32>
    %68 = arith.addf %67, %21 : vector<8x8xf32>
    %cst_47 = arith.constant dense<0xFF800000> : vector<8xf32>
    %69 = vector.multi_reduction <maximumf>, %68, %cst_47 [1] : vector<8x8xf32> to vector<8xf32>
    %70 = vector.shape_cast %69 : vector<8xf32> to vector<8x1xf32>
    %71 = vector.broadcast %70 : vector<8x1xf32> to vector<8x8xf32>
    %72 = arith.subf %68, %71 : vector<8x8xf32>
    %73 = math.exp %72 : vector<8x8xf32>
    %cst_48 = arith.constant dense<0.000000e+00> : vector<8xf32>
    %74 = vector.multi_reduction <add>, %73, %cst_48 [1] : vector<8x8xf32> to vector<8xf32>
    %75 = vector.shape_cast %74 : vector<8xf32> to vector<8x1xf32>
    %76 = tpu.reciprocal %75 {approx = true} : vector<8x1xf32> -> vector<8x1xf32>
    %77 = vector.broadcast %76 : vector<8x1xf32> to vector<8x8xf32>
    %78 = arith.mulf %73, %77 : vector<8x8xf32>
    %79 = arith.truncf %78 : vector<8x8xf32> to vector<8x8xbf16>
    %80 = vector.extract_strided_slice %43 {offsets = [0, 8], sizes = [8, 8], strides = [1, 1]} : vector<8x32xbf16> to vector<8x8xbf16>
    %cst_49 = arith.constant dense<0.000000e+00> : vector<8x8xf32>
    %81 = tpu.matmul %79, %80, %cst_49 {dimension_numbers = #tpu.dot_dimension_numbers<[1], [0], [0], [1], [0, 0, 1, 1], [], []>} : vector<8x8xbf16>, vector<8x8xbf16>, vector<8x8xf32> -> vector<8x8xf32>
    %82 = vector.extract_strided_slice %41 {offsets = [0, 16], sizes = [8, 8], strides = [1, 1]} : vector<8x32xbf16> to vector<8x8xbf16>
    %83 = vector.extract_strided_slice %42 {offsets = [0, 16], sizes = [8, 8], strides = [1, 1]} : vector<8x32xbf16> to vector<8x8xbf16>
    %cst_50 = arith.constant dense<0.000000e+00> : vector<8x8xf32>
    %84 = tpu.matmul %82, %83, %cst_50 {dimension_numbers = #tpu.dot_dimension_numbers<[1], [1], [0], [0], [0, 0, 1, 0], [], []>} : vector<8x8xbf16>, vector<8x8xbf16>, vector<8x8xf32> -> vector<8x8xf32>
    %cst_51 = arith.constant -9.000000e+15 : f32
    %85 = vector.broadcast %cst_51 : f32 to vector<8x8xf32>
    %86 = arith.select %23, %84, %85 : vector<8x8xi1>, vector<8x8xf32>
    %87 = arith.addf %86, %21 : vector<8x8xf32>
    %cst_52 = arith.constant dense<0xFF800000> : vector<8xf32>
    %88 = vector.multi_reduction <maximumf>, %87, %cst_52 [1] : vector<8x8xf32> to vector<8xf32>
    %89 = vector.shape_cast %88 : vector<8xf32> to vector<8x1xf32>
    %90 = vector.broadcast %89 : vector<8x1xf32> to vector<8x8xf32>
    %91 = arith.subf %87, %90 : vector<8x8xf32>
    %92 = math.exp %91 : vector<8x8xf32>
    %cst_53 = arith.constant dense<0.000000e+00> : vector<8xf32>
    %93 = vector.multi_reduction <add>, %92, %cst_53 [1] : vector<8x8xf32> to vector<8xf32>
    %94 = vector.shape_cast %93 : vector<8xf32> to vector<8x1xf32>
    %95 = tpu.reciprocal %94 {approx = true} : vector<8x1xf32> -> vector<8x1xf32>
    %96 = vector.broadcast %95 : vector<8x1xf32> to vector<8x8xf32>
    %97 = arith.mulf %92, %96 : vector<8x8xf32>
    %98 = arith.truncf %97 : vector<8x8xf32> to vector<8x8xbf16>
    %99 = vector.extract_strided_slice %43 {offsets = [0, 16], sizes = [8, 8], strides = [1, 1]} : vector<8x32xbf16> to vector<8x8xbf16>
    %cst_54 = arith.constant dense<0.000000e+00> : vector<8x8xf32>
    %100 = tpu.matmul %98, %99, %cst_54 {dimension_numbers = #tpu.dot_dimension_numbers<[1], [0], [0], [1], [0, 0, 1, 1], [], []>} : vector<8x8xbf16>, vector<8x8xbf16>, vector<8x8xf32> -> vector<8x8xf32>
    %101 = vector.extract_strided_slice %41 {offsets = [0, 24], sizes = [8, 8], strides = [1, 1]} : vector<8x32xbf16> to vector<8x8xbf16>
    %102 = vector.extract_strided_slice %42 {offsets = [0, 24], sizes = [8, 8], strides = [1, 1]} : vector<8x32xbf16> to vector<8x8xbf16>
    %cst_55 = arith.constant dense<0.000000e+00> : vector<8x8xf32>
    %103 = tpu.matmul %101, %102, %cst_55 {dimension_numbers = #tpu.dot_dimension_numbers<[1], [1], [0], [0], [0, 0, 1, 0], [], []>} : vector<8x8xbf16>, vector<8x8xbf16>, vector<8x8xf32> -> vector<8x8xf32>
    %cst_56 = arith.constant -9.000000e+15 : f32
    %104 = vector.broadcast %cst_56 : f32 to vector<8x8xf32>
    %105 = arith.select %23, %103, %104 : vector<8x8xi1>, vector<8x8xf32>
    %106 = arith.addf %105, %21 : vector<8x8xf32>
    %cst_57 = arith.constant dense<0xFF800000> : vector<8xf32>
    %107 = vector.multi_reduction <maximumf>, %106, %cst_57 [1] : vector<8x8xf32> to vector<8xf32>
    %108 = vector.shape_cast %107 : vector<8xf32> to vector<8x1xf32>
    %109 = vector.broadcast %108 : vector<8x1xf32> to vector<8x8xf32>
    %110 = arith.subf %106, %109 : vector<8x8xf32>
    %111 = math.exp %110 : vector<8x8xf32>
    %cst_58 = arith.constant dense<0.000000e+00> : vector<8xf32>
    %112 = vector.multi_reduction <add>, %111, %cst_58 [1] : vector<8x8xf32> to vector<8xf32>
    %113 = vector.shape_cast %112 : vector<8xf32> to vector<8x1xf32>
    %114 = tpu.reciprocal %113 {approx = true} : vector<8x1xf32> -> vector<8x1xf32>
    %115 = vector.broadcast %114 : vector<8x1xf32> to vector<8x8xf32>
    %116 = arith.mulf %111, %115 : vector<8x8xf32>
    %117 = arith.truncf %116 : vector<8x8xf32> to vector<8x8xbf16>
    %118 = vector.extract_strided_slice %43 {offsets = [0, 24], sizes = [8, 8], strides = [1, 1]} : vector<8x32xbf16> to vector<8x8xbf16>
    %cst_59 = arith.constant dense<0.000000e+00> : vector<8x8xf32>
    %119 = tpu.matmul %117, %118, %cst_59 {dimension_numbers = #tpu.dot_dimension_numbers<[1], [0], [0], [1], [0, 0, 1, 1], [], []>} : vector<8x8xbf16>, vector<8x8xbf16>, vector<8x8xf32> -> vector<8x8xf32>
    %120 = tpu.concatenate %62, %81, %100, %119 in 1 : vector<8x8xf32>, vector<8x8xf32>, vector<8x8xf32>, vector<8x8xf32> -> vector<8x32xf32>
    %121 = arith.addf %6, %120 : vector<8x32xf32>
    %c0_60 = arith.constant 0 : index
    %c1 = arith.constant 1 : index
    %c0_61 = arith.constant 0 : index
    %c0_62 = arith.constant 0 : index
    %122 = vector.load %arg4[%c0_60, %c1, %c0_61, %c0_62] : memref<1x2x8x8xf32, #tpu.memory_space<vmem>>, vector<1x1x8x8xf32>
    %123 = vector.shape_cast %122 : vector<1x1x8x8xf32> to vector<8x8xf32>
    %c0_63 = arith.constant 0 : index
    %c1_64 = arith.constant 1 : index
    %c0_65 = arith.constant 0 : index
    %c0_66 = arith.constant 0 : index
    %124 = vector.load %arg5[%c0_63, %c1_64, %c0_65, %c0_66] : memref<1x2x8x8xf32, #tpu.memory_space<vmem>>, vector<1x1x8x8xf32>
    %125 = vector.shape_cast %124 : vector<1x1x8x8xf32> to vector<8x8xf32>
    %cst_67 = arith.constant 0.000000e+00 : f32
    %126 = vector.broadcast %cst_67 : f32 to vector<8x8xf32>
    %127 = arith.cmpf ogt, %123, %126 : vector<8x8xf32>
    %c1_68 = arith.constant 1 : index
    %c0_69 = arith.constant 0 : index
    %c0_70 = arith.constant 0 : index
    %128 = vector.load %arg8[%c1_68, %c0_69, %c0_70] : memref<2x32x32xbf16, #tpu.memory_space<vmem>>, vector<1x32x32xbf16>
    %129 = vector.shape_cast %128 : vector<1x32x32xbf16> to vector<32x32xbf16>
    %cst_71 = arith.constant dense<0.000000e+00> : vector<8x32xf32>
    %130 = tpu.matmul %13, %129, %cst_71 {dimension_numbers = #tpu.dot_dimension_numbers<[1], [0], [0], [1], [0, 0, 1, 1], [], []>} : vector<8x32xbf16>, vector<32x32xbf16>, vector<8x32xf32> -> vector<8x32xf32>
    %131 = vector.extract_strided_slice %15 {offsets = [1, 0], sizes = [1, 32], strides = [1, 1]} : vector<2x32xf32> to vector<1x32xf32>
    %132 = vector.broadcast %131 : vector<1x32xf32> to vector<8x32xf32>
    %133 = arith.addf %130, %132 : vector<8x32xf32>
    %c1_72 = arith.constant 1 : index
    %c0_73 = arith.constant 0 : index
    %c0_74 = arith.constant 0 : index
    %134 = vector.load %arg10[%c1_72, %c0_73, %c0_74] : memref<2x32x32xbf16, #tpu.memory_space<vmem>>, vector<1x32x32xbf16>
    %135 = vector.shape_cast %134 : vector<1x32x32xbf16> to vector<32x32xbf16>
    %cst_75 = arith.constant dense<0.000000e+00> : vector<8x32xf32>
    %136 = tpu.matmul %14, %135, %cst_75 {dimension_numbers = #tpu.dot_dimension_numbers<[1], [0], [0], [1], [0, 0, 1, 1], [], []>} : vector<8x32xbf16>, vector<32x32xbf16>, vector<8x32xf32> -> vector<8x32xf32>
    %137 = vector.extract_strided_slice %16 {offsets = [1, 0], sizes = [1, 32], strides = [1, 1]} : vector<2x32xf32> to vector<1x32xf32>
    %138 = vector.broadcast %137 : vector<1x32xf32> to vector<8x32xf32>
    %139 = arith.addf %136, %138 : vector<8x32xf32>
    %c1_76 = arith.constant 1 : index
    %c0_77 = arith.constant 0 : index
    %c0_78 = arith.constant 0 : index
    %140 = vector.load %arg12[%c1_76, %c0_77, %c0_78] : memref<2x32x32xbf16, #tpu.memory_space<vmem>>, vector<1x32x32xbf16>
    %141 = vector.shape_cast %140 : vector<1x32x32xbf16> to vector<32x32xbf16>
    %cst_79 = arith.constant dense<0.000000e+00> : vector<8x32xf32>
    %142 = tpu.matmul %14, %141, %cst_79 {dimension_numbers = #tpu.dot_dimension_numbers<[1], [0], [0], [1], [0, 0, 1, 1], [], []>} : vector<8x32xbf16>, vector<32x32xbf16>, vector<8x32xf32> -> vector<8x32xf32>
    %cst_80 = arith.constant 0.353553385 : f32
    %143 = vector.broadcast %cst_80 : f32 to vector<8x32xf32>
    %144 = arith.mulf %133, %143 : vector<8x32xf32>
    %145 = arith.truncf %144 : vector<8x32xf32> to vector<8x32xbf16>
    %146 = arith.truncf %139 : vector<8x32xf32> to vector<8x32xbf16>
    %147 = arith.truncf %142 : vector<8x32xf32> to vector<8x32xbf16>
    %148 = vector.extract_strided_slice %145 {offsets = [0, 0], sizes = [8, 8], strides = [1, 1]} : vector<8x32xbf16> to vector<8x8xbf16>
    %149 = vector.extract_strided_slice %146 {offsets = [0, 0], sizes = [8, 8], strides = [1, 1]} : vector<8x32xbf16> to vector<8x8xbf16>
    %cst_81 = arith.constant dense<0.000000e+00> : vector<8x8xf32>
    %150 = tpu.matmul %148, %149, %cst_81 {dimension_numbers = #tpu.dot_dimension_numbers<[1], [1], [0], [0], [0, 0, 1, 0], [], []>} : vector<8x8xbf16>, vector<8x8xbf16>, vector<8x8xf32> -> vector<8x8xf32>
    %cst_82 = arith.constant -9.000000e+15 : f32
    %151 = vector.broadcast %cst_82 : f32 to vector<8x8xf32>
    %152 = arith.select %127, %150, %151 : vector<8x8xi1>, vector<8x8xf32>
    %153 = arith.addf %152, %125 : vector<8x8xf32>
    %cst_83 = arith.constant dense<0xFF800000> : vector<8xf32>
    %154 = vector.multi_reduction <maximumf>, %153, %cst_83 [1] : vector<8x8xf32> to vector<8xf32>
    %155 = vector.shape_cast %154 : vector<8xf32> to vector<8x1xf32>
    %156 = vector.broadcast %155 : vector<8x1xf32> to vector<8x8xf32>
    %157 = arith.subf %153, %156 : vector<8x8xf32>
    %158 = math.exp %157 : vector<8x8xf32>
    %cst_84 = arith.constant dense<0.000000e+00> : vector<8xf32>
    %159 = vector.multi_reduction <add>, %158, %cst_84 [1] : vector<8x8xf32> to vector<8xf32>
    %160 = vector.shape_cast %159 : vector<8xf32> to vector<8x1xf32>
    %161 = tpu.reciprocal %160 {approx = true} : vector<8x1xf32> -> vector<8x1xf32>
    %162 = vector.broadcast %161 : vector<8x1xf32> to vector<8x8xf32>
    %163 = arith.mulf %158, %162 : vector<8x8xf32>
    %164 = arith.truncf %163 : vector<8x8xf32> to vector<8x8xbf16>
    %165 = vector.extract_strided_slice %147 {offsets = [0, 0], sizes = [8, 8], strides = [1, 1]} : vector<8x32xbf16> to vector<8x8xbf16>
    %cst_85 = arith.constant dense<0.000000e+00> : vector<8x8xf32>
    %166 = tpu.matmul %164, %165, %cst_85 {dimension_numbers = #tpu.dot_dimension_numbers<[1], [0], [0], [1], [0, 0, 1, 1], [], []>} : vector<8x8xbf16>, vector<8x8xbf16>, vector<8x8xf32> -> vector<8x8xf32>
    %167 = vector.extract_strided_slice %145 {offsets = [0, 8], sizes = [8, 8], strides = [1, 1]} : vector<8x32xbf16> to vector<8x8xbf16>
    %168 = vector.extract_strided_slice %146 {offsets = [0, 8], sizes = [8, 8], strides = [1, 1]} : vector<8x32xbf16> to vector<8x8xbf16>
    %cst_86 = arith.constant dense<0.000000e+00> : vector<8x8xf32>
    %169 = tpu.matmul %167, %168, %cst_86 {dimension_numbers = #tpu.dot_dimension_numbers<[1], [1], [0], [0], [0, 0, 1, 0], [], []>} : vector<8x8xbf16>, vector<8x8xbf16>, vector<8x8xf32> -> vector<8x8xf32>
    %cst_87 = arith.constant -9.000000e+15 : f32
    %170 = vector.broadcast %cst_87 : f32 to vector<8x8xf32>
    %171 = arith.select %127, %169, %170 : vector<8x8xi1>, vector<8x8xf32>
    %172 = arith.addf %171, %125 : vector<8x8xf32>
    %cst_88 = arith.constant dense<0xFF800000> : vector<8xf32>
    %173 = vector.multi_reduction <maximumf>, %172, %cst_88 [1] : vector<8x8xf32> to vector<8xf32>
    %174 = vector.shape_cast %173 : vector<8xf32> to vector<8x1xf32>
    %175 = vector.broadcast %174 : vector<8x1xf32> to vector<8x8xf32>
    %176 = arith.subf %172, %175 : vector<8x8xf32>
    %177 = math.exp %176 : vector<8x8xf32>
    %cst_89 = arith.constant dense<0.000000e+00> : vector<8xf32>
    %178 = vector.multi_reduction <add>, %177, %cst_89 [1] : vector<8x8xf32> to vector<8xf32>
    %179 = vector.shape_cast %178 : vector<8xf32> to vector<8x1xf32>
    %180 = tpu.reciprocal %179 {approx = true} : vector<8x1xf32> -> vector<8x1xf32>
    %181 = vector.broadcast %180 : vector<8x1xf32> to vector<8x8xf32>
    %182 = arith.mulf %177, %181 : vector<8x8xf32>
    %183 = arith.truncf %182 : vector<8x8xf32> to vector<8x8xbf16>
    %184 = vector.extract_strided_slice %147 {offsets = [0, 8], sizes = [8, 8], strides = [1, 1]} : vector<8x32xbf16> to vector<8x8xbf16>
    %cst_90 = arith.constant dense<0.000000e+00> : vector<8x8xf32>
    %185 = tpu.matmul %183, %184, %cst_90 {dimension_numbers = #tpu.dot_dimension_numbers<[1], [0], [0], [1], [0, 0, 1, 1], [], []>} : vector<8x8xbf16>, vector<8x8xbf16>, vector<8x8xf32> -> vector<8x8xf32>
    %186 = vector.extract_strided_slice %145 {offsets = [0, 16], sizes = [8, 8], strides = [1, 1]} : vector<8x32xbf16> to vector<8x8xbf16>
    %187 = vector.extract_strided_slice %146 {offsets = [0, 16], sizes = [8, 8], strides = [1, 1]} : vector<8x32xbf16> to vector<8x8xbf16>
    %cst_91 = arith.constant dense<0.000000e+00> : vector<8x8xf32>
    %188 = tpu.matmul %186, %187, %cst_91 {dimension_numbers = #tpu.dot_dimension_numbers<[1], [1], [0], [0], [0, 0, 1, 0], [], []>} : vector<8x8xbf16>, vector<8x8xbf16>, vector<8x8xf32> -> vector<8x8xf32>
    %cst_92 = arith.constant -9.000000e+15 : f32
    %189 = vector.broadcast %cst_92 : f32 to vector<8x8xf32>
    %190 = arith.select %127, %188, %189 : vector<8x8xi1>, vector<8x8xf32>
    %191 = arith.addf %190, %125 : vector<8x8xf32>
    %cst_93 = arith.constant dense<0xFF800000> : vector<8xf32>
    %192 = vector.multi_reduction <maximumf>, %191, %cst_93 [1] : vector<8x8xf32> to vector<8xf32>
    %193 = vector.shape_cast %192 : vector<8xf32> to vector<8x1xf32>
    %194 = vector.broadcast %193 : vector<8x1xf32> to vector<8x8xf32>
    %195 = arith.subf %191, %194 : vector<8x8xf32>
    %196 = math.exp %195 : vector<8x8xf32>
    %cst_94 = arith.constant dense<0.000000e+00> : vector<8xf32>
    %197 = vector.multi_reduction <add>, %196, %cst_94 [1] : vector<8x8xf32> to vector<8xf32>
    %198 = vector.shape_cast %197 : vector<8xf32> to vector<8x1xf32>
    %199 = tpu.reciprocal %198 {approx = true} : vector<8x1xf32> -> vector<8x1xf32>
    %200 = vector.broadcast %199 : vector<8x1xf32> to vector<8x8xf32>
    %201 = arith.mulf %196, %200 : vector<8x8xf32>
    %202 = arith.truncf %201 : vector<8x8xf32> to vector<8x8xbf16>
    %203 = vector.extract_strided_slice %147 {offsets = [0, 16], sizes = [8, 8], strides = [1, 1]} : vector<8x32xbf16> to vector<8x8xbf16>
    %cst_95 = arith.constant dense<0.000000e+00> : vector<8x8xf32>
    %204 = tpu.matmul %202, %203, %cst_95 {dimension_numbers = #tpu.dot_dimension_numbers<[1], [0], [0], [1], [0, 0, 1, 1], [], []>} : vector<8x8xbf16>, vector<8x8xbf16>, vector<8x8xf32> -> vector<8x8xf32>
    %205 = vector.extract_strided_slice %145 {offsets = [0, 24], sizes = [8, 8], strides = [1, 1]} : vector<8x32xbf16> to vector<8x8xbf16>
    %206 = vector.extract_strided_slice %146 {offsets = [0, 24], sizes = [8, 8], strides = [1, 1]} : vector<8x32xbf16> to vector<8x8xbf16>
    %cst_96 = arith.constant dense<0.000000e+00> : vector<8x8xf32>
    %207 = tpu.matmul %205, %206, %cst_96 {dimension_numbers = #tpu.dot_dimension_numbers<[1], [1], [0], [0], [0, 0, 1, 0], [], []>} : vector<8x8xbf16>, vector<8x8xbf16>, vector<8x8xf32> -> vector<8x8xf32>
    %cst_97 = arith.constant -9.000000e+15 : f32
    %208 = vector.broadcast %cst_97 : f32 to vector<8x8xf32>
    %209 = arith.select %127, %207, %208 : vector<8x8xi1>, vector<8x8xf32>
    %210 = arith.addf %209, %125 : vector<8x8xf32>
    %cst_98 = arith.constant dense<0xFF800000> : vector<8xf32>
    %211 = vector.multi_reduction <maximumf>, %210, %cst_98 [1] : vector<8x8xf32> to vector<8xf32>
    %212 = vector.shape_cast %211 : vector<8xf32> to vector<8x1xf32>
    %213 = vector.broadcast %212 : vector<8x1xf32> to vector<8x8xf32>
    %214 = arith.subf %210, %213 : vector<8x8xf32>
    %215 = math.exp %214 : vector<8x8xf32>
    %cst_99 = arith.constant dense<0.000000e+00> : vector<8xf32>
    %216 = vector.multi_reduction <add>, %215, %cst_99 [1] : vector<8x8xf32> to vector<8xf32>
    %217 = vector.shape_cast %216 : vector<8xf32> to vector<8x1xf32>
    %218 = tpu.reciprocal %217 {approx = true} : vector<8x1xf32> -> vector<8x1xf32>
    %219 = vector.broadcast %218 : vector<8x1xf32> to vector<8x8xf32>
    %220 = arith.mulf %215, %219 : vector<8x8xf32>
    %221 = arith.truncf %220 : vector<8x8xf32> to vector<8x8xbf16>
    %222 = vector.extract_strided_slice %147 {offsets = [0, 24], sizes = [8, 8], strides = [1, 1]} : vector<8x32xbf16> to vector<8x8xbf16>
    %cst_100 = arith.constant dense<0.000000e+00> : vector<8x8xf32>
    %223 = tpu.matmul %221, %222, %cst_100 {dimension_numbers = #tpu.dot_dimension_numbers<[1], [0], [0], [1], [0, 0, 1, 1], [], []>} : vector<8x8xbf16>, vector<8x8xbf16>, vector<8x8xf32> -> vector<8x8xf32>
    %224 = tpu.concatenate %166, %185, %204, %223 in 1 : vector<8x8xf32>, vector<8x8xf32>, vector<8x8xf32>, vector<8x8xf32> -> vector<8x32xf32>
    %225 = arith.addf %121, %224 : vector<8x32xf32>
    %cst_101 = arith.constant dense<0.000000e+00> : vector<32xf32>
    %226 = vector.multi_reduction <add>, %17, %cst_101 [0] : vector<2x32xf32> to vector<32xf32>
    %227 = vector.shape_cast %226 : vector<32xf32> to vector<1x32xf32>
    %228 = vector.broadcast %227 : vector<1x32xf32> to vector<8x32xf32>
    %229 = arith.addf %225, %228 : vector<8x32xf32>
    %cst_102 = arith.constant 0.000000e+00 : f32
    %230 = vector.broadcast %cst_102 : f32 to vector<8x32xf32>
    %231 = arith.maximumf %229, %230 : vector<8x32xf32>
    %c0_103 = arith.constant 0 : index
    %c0_104 = arith.constant 0 : index
    %c0_105 = arith.constant 0 : index
    %232 = vector.load %arg14[%c0_103, %c0_104, %c0_105] : memref<1x8x32xf32, #tpu.memory_space<vmem>>, vector<1x8x32xf32>
    %233 = vector.shape_cast %232 : vector<1x8x32xf32> to vector<8x32xf32>
    %234 = vector.shape_cast %231 : vector<8x32xf32> to vector<1x8x32xf32>
    tpu.vector_store %arg14[%c0_103, %c0_104, %c0_105], %234 {strides = array<i32>} : memref<1x8x32xf32, #tpu.memory_space<vmem>>, vector<1x8x32xf32>,
    return
  }
  func.func @transform_0(%arg0: i32, %arg1: i32) -> (i32, i32, i32) {
    %c0_i32 = arith.constant 0 : i32
    %c0_i32_0 = arith.constant 0 : i32
    return %arg0, %arg1, %c0_i32 : i32, i32, i32
  }
  func.func @transform_1(%arg0: i32, %arg1: i32) -> (i32, i32, i32) {
    %c0_i32 = arith.constant 0 : i32
    %c0_i32_0 = arith.constant 0 : i32
    %c0_i32_1 = arith.constant 0 : i32
    return %arg0, %c0_i32, %c0_i32_0 : i32, i32, i32
  }
  func.func @transform_2(%arg0: i32, %arg1: i32) -> (i32, i32, i32, i32) {
    %c0_i32 = arith.constant 0 : i32
    %c0_i32_0 = arith.constant 0 : i32
    %c0_i32_1 = arith.constant 0 : i32
    return %arg0, %c0_i32, %arg1, %c0_i32_0 : i32, i32, i32, i32
  }
  func.func @transform_3(%arg0: i32, %arg1: i32) -> (i32, i32, i32, i32) {
    %c0_i32 = arith.constant 0 : i32
    %c0_i32_0 = arith.constant 0 : i32
    %c0_i32_1 = arith.constant 0 : i32
    return %arg0, %c0_i32, %arg1, %c0_i32_0 : i32, i32, i32, i32
  }
  func.func @transform_4(%arg0: i32, %arg1: i32) -> (i32, i32) {
    %c0_i32 = arith.constant 0 : i32
    %c0_i32_0 = arith.constant 0 : i32
    %c0_i32_1 = arith.constant 0 : i32
    return %c0_i32, %c0_i32_0 : i32, i32
  }
  func.func @transform_5(%arg0: i32, %arg1: i32) -> (i32, i32) {
    %c0_i32 = arith.constant 0 : i32
    %c0_i32_0 = arith.constant 0 : i32
    %c0_i32_1 = arith.constant 0 : i32
    return %c0_i32, %c0_i32_0 : i32, i32
  }
  func.func @transform_6(%arg0: i32, %arg1: i32) -> (i32, i32, i32) {
    %c0_i32 = arith.constant 0 : i32
    %c0_i32_0 = arith.constant 0 : i32
    %c0_i32_1 = arith.constant 0 : i32
    %c0_i32_2 = arith.constant 0 : i32
    return %c0_i32, %c0_i32_0, %c0_i32_1 : i32, i32, i32
  }
  func.func @transform_7(%arg0: i32, %arg1: i32) -> (i32, i32) {
    %c0_i32 = arith.constant 0 : i32
    %c0_i32_0 = arith.constant 0 : i32
    %c0_i32_1 = arith.constant 0 : i32
    return %c0_i32, %c0_i32_0 : i32, i32
  }
  func.func @transform_8(%arg0: i32, %arg1: i32) -> (i32, i32, i32) {
    %c0_i32 = arith.constant 0 : i32
    %c0_i32_0 = arith.constant 0 : i32
    %c0_i32_1 = arith.constant 0 : i32
    %c0_i32_2 = arith.constant 0 : i32
    return %c0_i32, %c0_i32_0, %c0_i32_1 : i32, i32, i32
  }
  func.func @transform_9(%arg0: i32, %arg1: i32) -> (i32, i32) {
    %c0_i32 = arith.constant 0 : i32
    %c0_i32_0 = arith.constant 0 : i32
    %c0_i32_1 = arith.constant 0 : i32
    return %c0_i32, %c0_i32_0 : i32, i32
  }
  func.func @transform_10(%arg0: i32, %arg1: i32) -> (i32, i32, i32) {
    %c0_i32 = arith.constant 0 : i32
    %c0_i32_0 = arith.constant 0 : i32
    %c0_i32_1 = arith.constant 0 : i32
    %c0_i32_2 = arith.constant 0 : i32
    return %c0_i32, %c0_i32_0, %c0_i32_1 : i32, i32, i32
  }
  func.func @transform_11(%arg0: i32, %arg1: i32) -> (i32, i32) {
    %c0_i32 = arith.constant 0 : i32
    %c0_i32_0 = arith.constant 0 : i32
    %c0_i32_1 = arith.constant 0 : i32
    return %c0_i32, %c0_i32_0 : i32, i32
  }
  func.func @transform_12(%arg0: i32, %arg1: i32) -> (i32, i32, i32) {
    %c0_i32 = arith.constant 0 : i32
    %c0_i32_0 = arith.constant 0 : i32
    return %arg0, %arg1, %c0_i32 : i32, i32, i32
  }
}

</mosaic_0001>

<llo_original>
// kernel: gattnet_forward.1
$region0: #{gattnet_forward.1}
  #allocation0 [shape = 'u32[]', space=smem, size = 0x4, offset = 0x4, fixed_abs, tag = 'smem constant byte address 0x4 - core index']
  #allocation1 [shape = 'u32[144,128]{1,0:T(1,128)}', space=vmem, size = 0x12000, scoped, tag = 'internal scratch']
  %s0 = inlined_call_operand.vmem [shape: bf16[2,8,32], index: 0, kind: input, shape index: {}, may-alias: {0,1}]
  %s1 = inlined_call_operand.vmem [shape: bf16[2,8,32], index: 1, kind: input, shape index: {}, may-alias: {0,1}]
  %s2 = inlined_call_operand.vmem [shape: f32[2,2,8,8], index: 2, kind: input, shape index: {}]
  %s3 = inlined_call_operand.vmem [shape: f32[2,2,8,8], index: 3, kind: input, shape index: {}]
  %s4 = inlined_call_operand.vmem [shape: bf16[32,32], index: 4, kind: input, shape index: {}]
  %s5 = inlined_call_operand.vmem [shape: f32[1,32], index: 5, kind: input, shape index: {}]
  %s6 = inlined_call_operand.vmem [shape: bf16[2,32,32], index: 6, kind: input, shape index: {}]
  %s7 = inlined_call_operand.vmem [shape: f32[2,32], index: 7, kind: input, shape index: {}]
  %s8 = inlined_call_operand.vmem [shape: bf16[2,32,32], index: 8, kind: input, shape index: {}]
  %s9 = inlined_call_operand.vmem [shape: f32[2,32], index: 9, kind: input, shape index: {}]
  %s10 = inlined_call_operand.vmem [shape: bf16[2,32,32], index: 10, kind: input, shape index: {}]
  %s11 = inlined_call_operand.vmem [shape: f32[2,32], index: 11, kind: input, shape index: {}]
  %s12 = inlined_call_operand.hbm [shape: f32[2,8,32], index: 12, kind: output, shape index: {}]
  %s13 = sld [smem:[#allocation0]]
  $region81: #{gattnet_forward.1} parent=0
    _
  %s15 = ssub.s32 1, %s13
  %s16 = scalar_select 0, %s15, %s13
  $region1: #{gattnet_forward.1} parent=0
    #allocation2 [shape = 'u8[8192]{0}', space=vmem, size = 0x2000, scoped, tag = 'output window, operand 0']
    #allocation3 [shape = 's32[2]{0}', space=sflag, size = 0x8, scoped, tag = 'scoped memory for gattnet_forward.1']
    %17 = vsyncpa [#allocation3], 0
    %s18 = scalar_lea.sflag [#allocation3], 1
    %19 = vsyncpa %s18, 0
    loop: start=0, step=1, limit=4
    $region2: #{gattnet_forward.1} parent=1 // loop_pre_header
      _
    $region3: #{gattnet_forward.1} parent=1 // loop_header
      %s21 = sphi 0, %s25
      %p22 = scmp.ge.s32.totalorder %s21, 4
      %s28 = sphi 0, %s40
      %s29 = sphi 0, %s36
      %s30 = sphi 0, %s28
      %s31 = sphi 0, %s29
      %s32 = sphi 0, %s30
      %s33 = sphi 0, %s31
      %s45 = sphi 0, %s47
      %s48 = sphi 0, %s45
      %s49 = sphi 0, %s48
      %s65 = sphi 0, %s49
      %s71 = sphi 0, %s73
      %s74 = sphi 0, %s71
      %s75 = sphi 0, %s74
      %s91 = sphi 0, %s75
      %s99 = sphi 0, %s101
      %s102 = sphi 0, %s99
      %s103 = sphi 0, %s102
      %s119 = sphi 0, %s103
      %s127 = sphi 0, %s129
      %s130 = sphi 0, %s127
      %s131 = sphi 0, %s130
      %s147 = sphi 0, %s131
      %s151 = sphi 0, %s151
      %s153 = sphi 0, %s151
      %s154 = sphi 0, %s153
      %s168 = sphi 0, %s154
      %s172 = sphi 0, %s172
      %s174 = sphi 0, %s172
      %s175 = sphi 0, %s174
      %s189 = sphi 0, %s175
      %s193 = sphi 0, %s193
      %s195 = sphi 0, %s193
      %s196 = sphi 0, %s195
      %s210 = sphi 0, %s196
      %s214 = sphi 0, %s214
      %s216 = sphi 0, %s214
      %s217 = sphi 0, %s216
      %s231 = sphi 0, %s217
      %s235 = sphi 0, %s235
      %s237 = sphi 0, %s235
      %s238 = sphi 0, %s237
      %s252 = sphi 0, %s238
      %s256 = sphi 0, %s256
      %s258 = sphi 0, %s256
      %s259 = sphi 0, %s258
      %s273 = sphi 0, %s259
      %s277 = sphi 0, %s277
      %s279 = sphi 0, %s277
      %s280 = sphi 0, %s279
      %s294 = sphi 0, %s280
      %s298 = sphi 0, %s298
      %s300 = sphi 0, %s298
      %s301 = sphi 0, %s300
      %s315 = sphi 0, %s301
      %s323 = sphi 0, %s325
      %s326 = sphi 0, %s323
      %s327 = sphi 0, %s326
      %s343 = sphi 0, %s327
    $region4: #{gattnet_forward.1} parent=1 // loop_header_branch
      %24 = sbr.rel (%p22) target = $region8
    $region5: #{gattnet_forward.1} parent=1 // loop_body
      %s26 = ssub.s32 %s21, 1
      %s27 = ssub.s32 %s21, 2
      %s34 = sadd.s32 1, %s29
      %p35 = scmp.ge.s32.totalorder %s34, 1
      %s36 = scalar_select %p35, 0, %s34
      %s37 = sadd.s32 1, %s28
      %s38 = scalar_select %p35, %s37, %s28
      %p39 = scmp.ge.s32.totalorder %s38, 2
      %s40 = scalar_select %p39, 0, %s38
      %s41 = ssub.s32 %s28, %s40
      %s42 = ssub.s32 %s29, %s36
      %s43 = sor.u32 %s41, %s42
      %p44 = scmp.eq.s32.totalorder %s43, 0
      %s46 = sadd.s32 %s45, 1
      %s47 = scalar_select %p44, %s45, %s46
      %p50 = pneg %p44
      %p51 = scmp.eq.s32.totalorder %s21, 1
      %p52 = por %p50, %p51
      %p53 = scmp.ne.s32.totalorder %s45, %s48
      %p54 = scmp.eq.s32.totalorder %s21, 0
      %p55 = por %p53, %p54
      %p56 = scmp.ne.s32.totalorder %s45, %s48
      %p57 = scmp.eq.s32.totalorder %s26, 1
      %p58 = por %p56, %p57
      %p59 = scmp.ne.s32.totalorder %s48, %s49
      %p60 = scmp.eq.s32.totalorder %s26, 0
      %p61 = por %p59, %p60
      %p62 = scmp.ne.s32.totalorder %s48, %s49
      %p63 = scmp.eq.s32.totalorder %s27, 1
      %p64 = por %p62, %p63
      %p66 = scmp.ne.s32.totalorder %s49, %s65
      %p67 = scmp.eq.s32.totalorder %s27, 0
      %p68 = por %p66, %p67
      %s69 = ssub.s32 %s28, %s40
      %p70 = scmp.eq.s32.totalorder %s69, 0
      %s72 = sadd.s32 %s71, 1
      %s73 = scalar_select %p70, %s71, %s72
      %p76 = pneg %p70
      %p77 = scmp.eq.s32.totalorder %s21, 1
      %p78 = por %p76, %p77
      %p79 = scmp.ne.s32.totalorder %s71, %s74
      %p80 = scmp.eq.s32.totalorder %s21, 0
      %p81 = por %p79, %p80
      %p82 = scmp.ne.s32.totalorder %s71, %s74
      %p83 = scmp.eq.s32.totalorder %s26, 1
      %p84 = por %p82, %p83
      %p85 = scmp.ne.s32.totalorder %s74, %s75
      %p86 = scmp.eq.s32.totalorder %s26, 0
      %p87 = por %p85, %p86
      %p88 = scmp.ne.s32.totalorder %s74, %s75
      %p89 = scmp.eq.s32.totalorder %s27, 1
      %p90 = por %p88, %p89
      %p92 = scmp.ne.s32.totalorder %s75, %s91
      %p93 = scmp.eq.s32.totalorder %s27, 0
      %p94 = por %p92, %p93
      %s95 = ssub.s32 %s28, %s40
      %s96 = ssub.s32 %s29, %s36
      %s97 = sor.u32 %s95, %s96
      %p98 = scmp.eq.s32.totalorder %s97, 0
      %s100 = sadd.s32 %s99, 1
      %s101 = scalar_select %p98, %s99, %s100
      %p104 = pneg %p98
      %p105 = scmp.eq.s32.totalorder %s21, 1
      %p106 = por %p104, %p105
      %p107 = scmp.ne.s32.totalorder %s99, %s102
      %p108 = scmp.eq.s32.totalorder %s21, 0
      %p109 = por %p107, %p108
      %p110 = scmp.ne.s32.totalorder %s99, %s102
      %p111 = scmp.eq.s32.totalorder %s26, 1
      %p112 = por %p110, %p111
      %p113 = scmp.ne.s32.totalorder %s102, %s103
      %p114 = scmp.eq.s32.totalorder %s26, 0
      %p115 = por %p113, %p114
      %p116 = scmp.ne.s32.totalorder %s102, %s103
      %p117 = scmp.eq.s32.totalorder %s27, 1
      %p118 = por %p116, %p117
      %p120 = scmp.ne.s32.totalorder %s103, %s119
      %p121 = scmp.eq.s32.totalorder %s27, 0
      %p122 = por %p120, %p121
      %s123 = ssub.s32 %s28, %s40
      %s124 = ssub.s32 %s29, %s36
      %s125 = sor.u32 %s123, %s124
      %p126 = scmp.eq.s32.totalorder %s125, 0
      %s128 = sadd.s32 %s127, 1
      %s129 = scalar_select %p126, %s127, %s128
      %p132 = pneg %p126
      %p133 = scmp.eq.s32.totalorder %s21, 1
      %p134 = por %p132, %p133
      %p135 = scmp.ne.s32.totalorder %s127, %s130
      %p136 = scmp.eq.s32.totalorder %s21, 0
      %p137 = por %p135, %p136
      %p138 = scmp.ne.s32.totalorder %s127, %s130
      %p139 = scmp.eq.s32.totalorder %s26, 1
      %p140 = por %p138, %p139
      %p141 = scmp.ne.s32.totalorder %s130, %s131
      %p142 = scmp.eq.s32.totalorder %s26, 0
      %p143 = por %p141, %p142
      %p144 = scmp.ne.s32.totalorder %s130, %s131
      %p145 = scmp.eq.s32.totalorder %s27, 1
      %p146 = por %p144, %p145
      %p148 = scmp.ne.s32.totalorder %s131, %s147
      %p149 = scmp.eq.s32.totalorder %s27, 0
      %p150 = por %p148, %p149
      %s152 = sadd.s32 %s151, 1
      %p155 = scmp.eq.s32.totalorder %s21, 1
      %p156 = scmp.ne.s32.totalorder %s151, %s153
      %p157 = scmp.eq.s32.totalorder %s21, 0
      %p158 = por %p156, %p157
      %p159 = scmp.ne.s32.totalorder %s151, %s153
      %p160 = scmp.eq.s32.totalorder %s26, 1
      %p161 = por %p159, %p160
      %p162 = scmp.ne.s32.totalorder %s153, %s154
      %p163 = scmp.eq.s32.totalorder %s26, 0
      %p164 = por %p162, %p163
      %p165 = scmp.ne.s32.totalorder %s153, %s154
      %p166 = scmp.eq.s32.totalorder %s27, 1
      %p167 = por %p165, %p166
      %p169 = scmp.ne.s32.totalorder %s154, %s168
      %p170 = scmp.eq.s32.totalorder %s27, 0
      %p171 = por %p169, %p170
      %s173 = sadd.s32 %s172, 1
      %p176 = scmp.eq.s32.totalorder %s21, 1
      %p177 = scmp.ne.s32.totalorder %s172, %s174
      %p178 = scmp.eq.s32.totalorder %s21, 0
      %p179 = por %p177, %p178
      %p180 = scmp.ne.s32.totalorder %s172, %s174
      %p181 = scmp.eq.s32.totalorder %s26, 1
      %p182 = por %p180, %p181
      %p183 = scmp.ne.s32.totalorder %s174, %s175
      %p184 = scmp.eq.s32.totalorder %s26, 0
      %p185 = por %p183, %p184
      %p186 = scmp.ne.s32.totalorder %s174, %s175
      %p187 = scmp.eq.s32.totalorder %s27, 1
      %p188 = por %p186, %p187
      %p190 = scmp.ne.s32.totalorder %s175, %s189
      %p191 = scmp.eq.s32.totalorder %s27, 0
      %p192 = por %p190, %p191
      %s194 = sadd.s32 %s193, 1
      %p197 = scmp.eq.s32.totalorder %s21, 1
      %p198 = scmp.ne.s32.totalorder %s193, %s195
      %p199 = scmp.eq.s32.totalorder %s21, 0
      %p200 = por %p198, %p199
      %p201 = scmp.ne.s32.totalorder %s193, %s195
      %p202 = scmp.eq.s32.totalorder %s26, 1
      %p203 = por %p201, %p202
      %p204 = scmp.ne.s32.totalorder %s195, %s196
      %p205 = scmp.eq.s32.totalorder %s26, 0
      %p206 = por %p204, %p205
      %p207 = scmp.ne.s32.totalorder %s195, %s196
      %p208 = scmp.eq.s32.totalorder %s27, 1
      %p209 = por %p207, %p208
      %p211 = scmp.ne.s32.totalorder %s196, %s210
      %p212 = scmp.eq.s32.totalorder %s27, 0
      %p213 = por %p211, %p212
      %s215 = sadd.s32 %s214, 1
      %p218 = scmp.eq.s32.totalorder %s21, 1
      %p219 = scmp.ne.s32.totalorder %s214, %s216
      %p220 = scmp.eq.s32.totalorder %s21, 0
      %p221 = por %p219, %p220
      %p222 = scmp.ne.s32.totalorder %s214, %s216
      %p223 = scmp.eq.s32.totalorder %s26, 1
      %p224 = por %p222, %p223
      %p225 = scmp.ne.s32.totalorder %s216, %s217
      %p226 = scmp.eq.s32.totalorder %s26, 0
      %p227 = por %p225, %p226
      %p228 = scmp.ne.s32.totalorder %s216, %s217
      %p229 = scmp.eq.s32.totalorder %s27, 1
      %p230 = por %p228, %p229
      %p232 = scmp.ne.s32.totalorder %s217, %s231
      %p233 = scmp.eq.s32.totalorder %s27, 0
      %p234 = por %p232, %p233
      %s236 = sadd.s32 %s235, 1
      %p239 = scmp.eq.s32.totalorder %s21, 1
      %p240 = scmp.ne.s32.totalorder %s235, %s237
      %p241 = scmp.eq.s32.totalorder %s21, 0
      %p242 = por %p240, %p241
      %p243 = scmp.ne.s32.totalorder %s235, %s237
      %p244 = scmp.eq.s32.totalorder %s26, 1
      %p245 = por %p243, %p244
      %p246 = scmp.ne.s32.totalorder %s237, %s238
      %p247 = scmp.eq.s32.totalorder %s26, 0
      %p248 = por %p246, %p247
      %p249 = scmp.ne.s32.totalorder %s237, %s238
      %p250 = scmp.eq.s32.totalorder %s27, 1
      %p251 = por %p249, %p250
      %p253 = scmp.ne.s32.totalorder %s238, %s252
      %p254 = scmp.eq.s32.totalorder %s27, 0
      %p255 = por %p253, %p254
      %s257 = sadd.s32 %s256, 1
      %p260 = scmp.eq.s32.totalorder %s21, 1
      %p261 = scmp.ne.s32.totalorder %s256, %s258
      %p262 = scmp.eq.s32.totalorder %s21, 0
      %p263 = por %p261, %p262
      %p264 = scmp.ne.s32.totalorder %s256, %s258
      %p265 = scmp.eq.s32.totalorder %s26, 1
      %p266 = por %p264, %p265
      %p267 = scmp.ne.s32.totalorder %s258, %s259
      %p268 = scmp.eq.s32.totalorder %s26, 0
      %p269 = por %p267, %p268
      %p270 = scmp.ne.s32.totalorder %s258, %s259
      %p271 = scmp.eq.s32.totalorder %s27, 1
      %p272 = por %p270, %p271
      %p274 = scmp.ne.s32.totalorder %s259, %s273
      %p275 = scmp.eq.s32.totalorder %s27, 0
      %p276 = por %p274, %p275
      %s278 = sadd.s32 %s277, 1
      %p281 = scmp.eq.s32.totalorder %s21, 1
      %p282 = scmp.ne.s32.totalorder %s277, %s279
      %p283 = scmp.eq.s32.totalorder %s21, 0
      %p284 = por %p282, %p283
      %p285 = scmp.ne.s32.totalorder %s277, %s279
      %p286 = scmp.eq.s32.totalorder %s26, 1
      %p287 = por %p285, %p286
      %p288 = scmp.ne.s32.totalorder %s279, %s280
      %p289 = scmp.eq.s32.totalorder %s26, 0
      %p290 = por %p288, %p289
      %p291 = scmp.ne.s32.totalorder %s279, %s280
      %p292 = scmp.eq.s32.totalorder %s27, 1
      %p293 = por %p291, %p292
      %p295 = scmp.ne.s32.totalorder %s280, %s294
      %p296 = scmp.eq.s32.totalorder %s27, 0
      %p297 = por %p295, %p296
      %s299 = sadd.s32 %s298, 1
      %p302 = scmp.eq.s32.totalorder %s21, 1
      %p303 = scmp.ne.s32.totalorder %s298, %s300
      %p304 = scmp.eq.s32.totalorder %s21, 0
      %p305 = por %p303, %p304
      %p306 = scmp.ne.s32.totalorder %s298, %s300
      %p307 = scmp.eq.s32.totalorder %s26, 1
      %p308 = por %p306, %p307
      %p309 = scmp.ne.s32.totalorder %s300, %s301
      %p310 = scmp.eq.s32.totalorder %s26, 0
      %p311 = por %p309, %p310
      %p312 = scmp.ne.s32.totalorder %s300, %s301
      %p313 = scmp.eq.s32.totalorder %s27, 1
      %p314 = por %p312, %p313
      %p316 = scmp.ne.s32.totalorder %s301, %s315
      %p317 = scmp.eq.s32.totalorder %s27, 0
      %p318 = por %p316, %p317
      %s319 = ssub.s32 %s28, %s40
      %s320 = ssub.s32 %s29, %s36
      %s321 = sor.u32 %s319, %s320
      %p322 = scmp.eq.s32.totalorder %s321, 0
      %s324 = sadd.s32 %s323, 1
      %s325 = scalar_select %p322, %s323, %s324
      %p328 = pneg %p322
      %p329 = scmp.eq.s32.totalorder %s21, 1
      %p330 = por %p328, %p329
      %p331 = scmp.ne.s32.totalorder %s323, %s326
      %p332 = scmp.eq.s32.totalorder %s21, 0
      %p333 = por %p331, %p332
      %p334 = scmp.ne.s32.totalorder %s323, %s326
      %p335 = scmp.eq.s32.totalorder %s26, 1
      %p336 = por %p334, %p335
      %p337 = scmp.ne.s32.totalorder %s326, %s327
      %p338 = scmp.eq.s32.totalorder %s26, 0
      %p339 = por %p337, %p338
      %p340 = scmp.ne.s32.totalorder %s326, %s327
      %p341 = scmp.eq.s32.totalorder %s27, 1
      %p342 = por %p340, %p341
      %p344 = scmp.ne.s32.totalorder %s327, %s343
      %p345 = scmp.eq.s32.totalorder %s27, 0
      %p346 = por %p344, %p345
      %p347 = scmp.le.s32.totalorder 1, %s21
      %p348 = scmp.lt.s32.totalorder %s21, 3
      %p349 = pnand %p347, %p348
      %p350 = pneg %p349
      // Predicated region
      $region9: #{gattnet_forward.1} parent=5 // pred_check
        _
      $region10: #{gattnet_forward.1} parent=5 // pred_check_branch
        %352 = sbr.rel (%p349) target = $region12
      $region11: #{gattnet_forward.1} parent=5 // pred_region
        %s353 = ssub.s32 %s21, 1
        // Predicated region
        $region13: #{gattnet_forward.1} parent=11 // pred_check
          %p354 = pneg %p164
        $region14: #{gattnet_forward.1} parent=11 // pred_check_branch
          %356 = sbr.rel (%p354) target = $region16
        $region15: #{gattnet_forward.1} parent=11 // pred_region
          _
        $region16: #{gattnet_forward.1} parent=11 // pred_fallthru
          _
        // Predicated region
        $region17: #{gattnet_forward.1} parent=11 // pred_check
          %p357 = pneg %p185
        $region18: #{gattnet_forward.1} parent=11 // pred_check_branch
          %359 = sbr.rel (%p357) target = $region20
        $region19: #{gattnet_forward.1} parent=11 // pred_region
          _
        $region20: #{gattnet_forward.1} parent=11 // pred_fallthru
          _
        // Predicated region
        $region21: #{gattnet_forward.1} parent=11 // pred_check
          %p360 = pneg %p206
        $region22: #{gattnet_forward.1} parent=11 // pred_check_branch
          %362 = sbr.rel (%p360) target = $region24
        $region23: #{gattnet_forward.1} parent=11 // pred_region
          _
        $region24: #{gattnet_forward.1} parent=11 // pred_fallthru
          _
        // Predicated region
        $region25: #{gattnet_forward.1} parent=11 // pred_check
          %p363 = pneg %p227
        $region26: #{gattnet_forward.1} parent=11 // pred_check_branch
          %365 = sbr.rel (%p363) target = $region28
        $region27: #{gattnet_forward.1} parent=11 // pred_region
          _
        $region28: #{gattnet_forward.1} parent=11 // pred_fallthru
          _
        // Predicated region
        $region29: #{gattnet_forward.1} parent=11 // pred_check
          %p366 = pneg %p248
        $region30: #{gattnet_forward.1} parent=11 // pred_check_branch
          %368 = sbr.rel (%p366) target = $region32
        $region31: #{gattnet_forward.1} parent=11 // pred_region
          _
        $region32: #{gattnet_forward.1} parent=11 // pred_fallthru
          _
        // Predicated region
        $region33: #{gattnet_forward.1} parent=11 // pred_check
          %p369 = pneg %p269
        $region34: #{gattnet_forward.1} parent=11 // pred_check_branch
          %371 = sbr.rel (%p369) target = $region36
        $region35: #{gattnet_forward.1} parent=11 // pred_region
          _
        $region36: #{gattnet_forward.1} parent=11 // pred_fallthru
          _
        // Predicated region
        $region37: #{gattnet_forward.1} parent=11 // pred_check
          %p372 = pneg %p290
        $region38: #{gattnet_forward.1} parent=11 // pred_check_branch
          %374 = sbr.rel (%p372) target = $region40
        $region39: #{gattnet_forward.1} parent=11 // pred_region
          _
        $region40: #{gattnet_forward.1} parent=11 // pred_fallthru
          _
        // Predicated region
        $region41: #{gattnet_forward.1} parent=11 // pred_check
          %p375 = pneg %p311
        $region42: #{gattnet_forward.1} parent=11 // pred_check_branch
          %377 = sbr.rel (%p375) target = $region44
        $region43: #{gattnet_forward.1} parent=11 // pred_region
          _
        $region44: #{gattnet_forward.1} parent=11 // pred_fallthru
          _
      $region12: #{gattnet_forward.1} parent=5 // pred_fallthru
        _
      %p378 = scmp.lt.s32.totalorder %s21, 2
      // Predicated region
      $region45: #{gattnet_forward.1} parent=5 // pred_check
        %p379 = pneg %p378
      $region46: #{gattnet_forward.1} parent=5 // pred_check_branch
        %381 = sbr.rel (%p379) target = $region48
      $region47: #{gattnet_forward.1} parent=5 // pred_region
        // Predicated region
        $region49: #{gattnet_forward.1} parent=47 // pred_check
          %p382 = pneg %p55
        $region50: #{gattnet_forward.1} parent=47 // pred_check_branch
          %384 = sbr.rel (%p382) target = $region52
        $region51: #{gattnet_forward.1} parent=47 // pred_region
          %p385 = scmp.lt.s32.totalorder %s28, 1
          %s386 = scalar_select %p385, %s28, 1
          %p387 = scmp.lt.s32.totalorder %s29, 0
          %s388 = scalar_select %p387, %s29, 0
          %s389 = sadd.s32 %s388, %s386
          %s390 = smul.addr %s389, 4
          %s391 = scalar_lea.vmem %s0, %s390
        $region52: #{gattnet_forward.1} parent=47 // pred_fallthru
          _
        // Predicated region
        $region53: #{gattnet_forward.1} parent=47 // pred_check
          %p392 = pneg %p81
        $region54: #{gattnet_forward.1} parent=47 // pred_check_branch
          %394 = sbr.rel (%p392) target = $region56
        $region55: #{gattnet_forward.1} parent=47 // pred_region
          %p395 = scmp.lt.s32.totalorder %s28, 1
          %s396 = scalar_select %p395, %s28, 1
          %s397 = smul.addr %s396, 4
          %s398 = scalar_lea.vmem %s1, %s397
        $region56: #{gattnet_forward.1} parent=47 // pred_fallthru
          _
        // Predicated region
        $region57: #{gattnet_forward.1} parent=47 // pred_check
          %p399 = pneg %p109
        $region58: #{gattnet_forward.1} parent=47 // pred_check_branch
          %401 = sbr.rel (%p399) target = $region60
        $region59: #{gattnet_forward.1} parent=47 // pred_region
          %p402 = scmp.lt.s32.totalorder %s28, 1
          %s403 = scalar_select %p402, %s28, 1
          %p404 = scmp.lt.s32.totalorder %s29, 0
          %s405 = scalar_select %p404, %s29, 0
          %s406 = smul.addr %s403, 2
          %s407 = sadd.s32 %s405, %s406
          %s408 = smul.addr %s407, 8
          %s409 = scalar_lea.vmem %s2, %s408
        $region60: #{gattnet_forward.1} parent=47 // pred_fallthru
          _
        // Predicated region
        $region61: #{gattnet_forward.1} parent=47 // pred_check
          %p410 = pneg %p137
        $region62: #{gattnet_forward.1} parent=47 // pred_check_branch
          %412 = sbr.rel (%p410) target = $region64
        $region63: #{gattnet_forward.1} parent=47 // pred_region
          %p413 = scmp.lt.s32.totalorder %s28, 1
          %s414 = scalar_select %p413, %s28, 1
          %p415 = scmp.lt.s32.totalorder %s29, 0
          %s416 = scalar_select %p415, %s29, 0
          %s417 = smul.addr %s414, 2
          %s418 = sadd.s32 %s416, %s417
          %s419 = smul.addr %s418, 8
          %s420 = scalar_lea.vmem %s3, %s419
        $region64: #{gattnet_forward.1} parent=47 // pred_fallthru
          _
      $region48: #{gattnet_forward.1} parent=5 // pred_fallthru
        _
      %p421 = scmp.le.s32.totalorder 1, %s21
      %p422 = scmp.lt.s32.totalorder %s21, 3
      %p423 = pnand %p421, %p422
      %p424 = pneg %p423
      // Predicated region
      $region65: #{gattnet_forward.1} parent=5 // pred_check
        _
      $region66: #{gattnet_forward.1} parent=5 // pred_check_branch
        %426 = sbr.rel (%p423) target = $region68
      $region67: #{gattnet_forward.1} parent=5 // pred_region
        %s427 = ssub.s32 %s21, 1
        %p428 = scmp.lt.s32.totalorder %s30, 1
        %s429 = scalar_select %p428, %s30, 1
        %p430 = scmp.lt.s32.totalorder %s31, 0
        %s431 = scalar_select %p430, %s31, 0
        %s432 = sadd.s32 %s431, %s429
        %s433 = smul.addr %s432, 4
        %s434 = scalar_lea.vmem %s0, %s433
        %p435 = pneg %p61
        %p436 = pneg %p58
        %p437 = scmp.lt.s32.totalorder %s30, 1
        %s438 = scalar_select %p437, %s30, 1
        %s439 = smul.addr %s438, 4
        %s440 = scalar_lea.vmem %s1, %s439
        %p441 = pneg %p87
        %p442 = pneg %p84
        %p443 = scmp.lt.s32.totalorder %s30, 1
        %s444 = scalar_select %p443, %s30, 1
        %p445 = scmp.lt.s32.totalorder %s31, 0
        %s446 = scalar_select %p445, %s31, 0
        %s447 = smul.addr %s444, 2
        %s448 = sadd.s32 %s446, %s447
        %s449 = smul.addr %s448, 8
        %s450 = scalar_lea.vmem %s2, %s449
        %p451 = pneg %p115
        %p452 = pneg %p112
        %p453 = scmp.lt.s32.totalorder %s30, 1
        %s454 = scalar_select %p453, %s30, 1
        %p455 = scmp.lt.s32.totalorder %s31, 0
        %s456 = scalar_select %p455, %s31, 0
        %s457 = smul.addr %s454, 2
        %s458 = sadd.s32 %s456, %s457
        %s459 = smul.addr %s458, 8
        %s460 = scalar_lea.vmem %s3, %s459
        %p461 = pneg %p143
        %p462 = pneg %p140
        %p463 = pneg %p164
        %p464 = pneg %p161
        %p465 = pneg %p185
        %p466 = pneg %p182
        %p467 = pneg %p206
        %p468 = pneg %p203
        %p469 = pneg %p227
        %p470 = pneg %p224
        %p471 = pneg %p248
        %p472 = pneg %p245
        %p473 = pneg %p269
        %p474 = pneg %p266
        %p475 = pneg %p290
        %p476 = pneg %p287
        %p477 = pneg %p311
        %p478 = pneg %p308
        %p479 = pneg %p339
        %p480 = pneg %p336
        %s481 = sand.u32 %s326, 1
        %s482 = scalar_lea.sflag [#allocation3], %s481
        %s483 = sand.u32 %s326, 1
        %s484 = smul.addr %s483, 8
        %s485 = scalar_lea.vmem [#allocation2], %s484
        %p486 = scmp.lt.s32.totalorder %s30, 1
        %s487 = scalar_select %p486, %s30, 1
        %p488 = scmp.lt.s32.totalorder %s31, 0
        %s489 = scalar_select %p488, %s31, 0
        %s490 = sadd.s32 %s489, %s487
        %s491 = smul.addr %s490, 4
        %s492 = scalar_lea.vmem %s0, %s491
        %p493 = scmp.lt.s32.totalorder %s30, 1
        %s494 = scalar_select %p493, %s30, 1
        %s495 = smul.addr %s494, 4
        %s496 = scalar_lea.vmem %s1, %s495
        %p497 = scmp.lt.s32.totalorder %s30, 1
        %s498 = scalar_select %p497, %s30, 1
        %p499 = scmp.lt.s32.totalorder %s31, 0
        %s500 = scalar_select %p499, %s31, 0
        %s501 = smul.addr %s498, 2
        %s502 = sadd.s32 %s500, %s501
        %s503 = smul.addr %s502, 8
        %s504 = scalar_lea.vmem %s2, %s503
        %p505 = scmp.lt.s32.totalorder %s30, 1
        %s506 = scalar_select %p505, %s30, 1
        %p507 = scmp.lt.s32.totalorder %s31, 0
        %s508 = scalar_select %p507, %s31, 0
        %s509 = smul.addr %s506, 2
        %s510 = sadd.s32 %s508, %s509
        %s511 = smul.addr %s510, 8
        %s512 = scalar_lea.vmem %s3, %s511
        %v514 = vld [vmem:[%s5] sm:$0x1]
        %v515 = vld [vmem:[%s492] sm:$0xf]
        %v516 = vld [vmem:[%s4] sm:$0xf]
        %v517 = vld [vmem:[%s4 + $0x4] sm:$0xf]
        %v518 = vld [vmem:[%s4 + $0x8] sm:$0xf]
        %v519 = vld [vmem:[%s4 + $0xc] sm:$0xf]
        %v521 = vlaneseq
        %v522 = vshrl.u32 %v521, 7
        %v523 = vsub.s32 0, %v522
        %v524 = vrot.slane %v514, %v523
        %v530 = vunpack.c.l.b16 %v516
        %v531 = vunpack.c.l.b16 %v517
        %v532 = vunpack.c.l.b16 %v518
        %v533 = vunpack.c.l.b16 %v519
        %v534 = vpack.c.b16 %v531, %v530
        %v535 = vpack.c.b16 %v533, %v532
        %vm538 = vcmask 261120
        %v540 = vsel %vm538, %v515, 0
        %542 = vmatprep.subr.bf16.mxu0 0
        %543 = vmatpush1.bf16.msra.mxu0 0
        %544 = vmatprep.subr.bf16.mxu0 0
        %545 = vmatpush1.bf16.msra.mxu0 0
        %546 = vmatprep.subr.bf16.mxu0 0
        %547 = vmatpush1.bf16.msra.mxu0 0
        %548 = vmatprep.subr.bf16.mxu0 0
        %549 = vmatpush1.bf16.msra.mxu0 0
        %550 = vmatprep.subr.bf16.mxu0 0
        %551 = vmatpush1.bf16.msra.mxu0 0
        %552 = vmatprep.subr.bf16.mxu0 0
        %553 = vmatpush1.bf16.msra.mxu0 0
        %554 = vmatprep.subr.bf16.mxu0 0
        %555 = vmatpush1.bf16.msra.mxu0 %v535
        %556 = vmatprep.subr.bf16.mxu0 0
        %557 = vmatpush1.bf16.msra.mxu0 %v534
        %558 = vmatprep.subr.bf16.mxu0 0
        %559 = vmatpush2.bf16.msra.mxu0 0
        %560 = vmatprep.subr.bf16.mxu0 0
        %561 = vmatpush2.bf16.msra.mxu0 0
        %562 = vmatprep.subr.bf16.mxu0 0
        %563 = vmatpush2.bf16.msra.mxu0 0
        %564 = vmatprep.subr.bf16.mxu0 0
        %565 = vmatpush2.bf16.msra.mxu0 0
        %566 = vmatprep.subr.bf16.mxu0 0
        %567 = vmatpush2.bf16.msra.mxu0 0
        %568 = vmatprep.subr.bf16.mxu0 0
        %569 = vmatpush2.bf16.msra.mxu0 0
        %570 = vmatprep.subr.bf16.mxu0 0
        %571 = vmatpush2.bf16.msra.mxu0 0
        %572 = vmatprep.subr.bf16.mxu0 0
        %573 = vmatpush2.bf16.msra.mxu0 0
        %574 = vmatprep.mubr.bf16.mxu0 0
        %575 = vmatmul.mubr.bf16.gmra.mxu0 %v540
        %v576 = vpop.f32.mrf.mxu0
        %v577 = vadd.f32 %v524, %v576
        %v578 = vpop.f32.mrf.mxu0
        %v579 = vpop.f32.mrf.mxu0
        %v580 = vpop.f32.mrf.mxu0
        %581 = vdwg.mxu0
        %v582 = vld [vmem:[%s496] sm:$0xf]
        %v584 = vsel %vm538, %v582, 0
        %586 = vmatprep.subr.bf16.mxu0 0
        %587 = vmatpush1.bf16.msra.mxu0 0
        %588 = vmatprep.subr.bf16.mxu0 0
        %589 = vmatpush1.bf16.msra.mxu0 0
        %590 = vmatprep.subr.bf16.mxu0 0
        %591 = vmatpush1.bf16.msra.mxu0 0
        %592 = vmatprep.subr.bf16.mxu0 0
        %593 = vmatpush1.bf16.msra.mxu0 0
        %594 = vmatprep.subr.bf16.mxu0 0
        %595 = vmatpush1.bf16.msra.mxu0 0
        %596 = vmatprep.subr.bf16.mxu0 0
        %597 = vmatpush1.bf16.msra.mxu0 0
        %598 = vmatprep.subr.bf16.mxu0 0
        %599 = vmatpush1.bf16.msra.mxu0 %v535
        %600 = vmatprep.subr.bf16.mxu0 0
        %601 = vmatpush1.bf16.msra.mxu0 %v534
        %602 = vmatprep.subr.bf16.mxu0 0
        %603 = vmatpush2.bf16.msra.mxu0 0
        %604 = vmatprep.subr.bf16.mxu0 0
        %605 = vmatpush2.bf16.msra.mxu0 0
        %606 = vmatprep.subr.bf16.mxu0 0
        %607 = vmatpush2.bf16.msra.mxu0 0
        %608 = vmatprep.subr.bf16.mxu0 0
        %609 = vmatpush2.bf16.msra.mxu0 0
        %610 = vmatprep.subr.bf16.mxu0 0
        %611 = vmatpush2.bf16.msra.mxu0 0
        %612 = vmatprep.subr.bf16.mxu0 0
        %613 = vmatpush2.bf16.msra.mxu0 0
        %614 = vmatprep.subr.bf16.mxu0 0
        %615 = vmatpush2.bf16.msra.mxu0 0
        %616 = vmatprep.subr.bf16.mxu0 0
        %617 = vmatpush2.bf16.msra.mxu0 0
        %618 = vmatprep.mubr.bf16.mxu0 0
        %619 = vmatmul.mubr.bf16.gmra.mxu0 %v584
        %v620 = vpop.f32.mrf.mxu0
        %v621 = vadd.f32 %v524, %v620
        %v622 = vpop.f32.mrf.mxu0
        %v623 = vpop.f32.mrf.mxu0
        %v624 = vpop.f32.mrf.mxu0
        %625 = vdwg.mxu0
        %v626 = vpack.c.bf16 %v577, %v577
        %v627 = vpack.c.bf16 %v621, %v621
        %v628 = vld [vmem:[%s7] sm:$0x3]
        %v629 = vld [vmem:[%s9] sm:$0x3]
        %v630 = vld [vmem:[%s11] sm:$0x3]
        %v631 = vld [vmem:[%s504] sm:$0xff]
        %v632 = vld [vmem:[%s512] sm:$0xff]
        %vm633 = vcmp.gt.f32.partialorder %v631, 0.0
        %v634 = vld [vmem:[%s6] sm:$0xf]
        %v635 = vld [vmem:[%s6 + $0x4] sm:$0xf]
        %v636 = vld [vmem:[%s6 + $0x8] sm:$0xf]
        %v637 = vld [vmem:[%s6 + $0xc] sm:$0xf]
        %v638 = vlaneseq
        %v639 = vshrl.u32 %v638, 7
        %v640 = vsub.s32 0, %v639
        %v641 = vrot.slane %v628, %v640
        %v646 = vunpack.c.l.b16 %v634
        %v647 = vunpack.c.l.b16 %v635
        %v648 = vunpack.c.l.b16 %v636
        %v649 = vunpack.c.l.b16 %v637
        %v650 = vpack.c.b16 %v647, %v646
        %v651 = vpack.c.b16 %v649, %v648
        %v655 = vsel %vm538, %v626, 0
        %657 = vmatprep.subr.bf16.mxu0 0
        %658 = vmatpush1.bf16.msra.mxu0 0
        %659 = vmatprep.subr.bf16.mxu0 0
        %660 = vmatpush1.bf16.msra.mxu0 0
        %661 = vmatprep.subr.bf16.mxu0 0
        %662 = vmatpush1.bf16.msra.mxu0 0
        %663 = vmatprep.subr.bf16.mxu0 0
        %664 = vmatpush1.bf16.msra.mxu0 0
        %665 = vmatprep.subr.bf16.mxu0 0
        %666 = vmatpush1.bf16.msra.mxu0 0
        %667 = vmatprep.subr.bf16.mxu0 0
        %668 = vmatpush1.bf16.msra.mxu0 0
        %669 = vmatprep.subr.bf16.mxu0 0
        %670 = vmatpush1.bf16.msra.mxu0 %v651
        %671 = vmatprep.subr.bf16.mxu0 0
        %672 = vmatpush1.bf16.msra.mxu0 %v650
        %673 = vmatprep.subr.bf16.mxu0 0
        %674 = vmatpush2.bf16.msra.mxu0 0
        %675 = vmatprep.subr.bf16.mxu0 0
        %676 = vmatpush2.bf16.msra.mxu0 0
        %677 = vmatprep.subr.bf16.mxu0 0
        %678 = vmatpush2.bf16.msra.mxu0 0
        %679 = vmatprep.subr.bf16.mxu0 0
        %680 = vmatpush2.bf16.msra.mxu0 0
        %681 = vmatprep.subr.bf16.mxu0 0
        %682 = vmatpush2.bf16.msra.mxu0 0
        %683 = vmatprep.subr.bf16.mxu0 0
        %684 = vmatpush2.bf16.msra.mxu0 0
        %685 = vmatprep.subr.bf16.mxu0 0
        %686 = vmatpush2.bf16.msra.mxu0 0
        %687 = vmatprep.subr.bf16.mxu0 0
        %688 = vmatpush2.bf16.msra.mxu0 0
        %689 = vmatprep.mubr.bf16.mxu0 0
        %690 = vmatmul.mubr.bf16.gmra.mxu0 %v655
        %v691 = vpop.f32.mrf.mxu0
        %v692 = vadd.f32 %v641, %v691
        %v693 = vpop.f32.mrf.mxu0
        %v694 = vpop.f32.mrf.mxu0
        %v695 = vpop.f32.mrf.mxu0
        %696 = vdwg.mxu0
        %v697 = vld [vmem:[%s8] sm:$0xf]
        %v698 = vld [vmem:[%s8 + $0x4] sm:$0xf]
        %v699 = vld [vmem:[%s8 + $0x8] sm:$0xf]
        %v700 = vld [vmem:[%s8 + $0xc] sm:$0xf]
        %v701 = vlaneseq
        %v702 = vshrl.u32 %v701, 7
        %v703 = vsub.s32 0, %v702
        %v704 = vrot.slane %v629, %v703
        %v709 = vunpack.c.l.b16 %v697
        %v710 = vunpack.c.l.b16 %v698
        %v711 = vunpack.c.l.b16 %v699
        %v712 = vunpack.c.l.b16 %v700
        %v713 = vpack.c.b16 %v710, %v709
        %v714 = vpack.c.b16 %v712, %v711
        %v718 = vsel %vm538, %v627, 0
        %720 = vmatprep.subr.bf16.mxu0 0
        %721 = vmatpush1.bf16.msra.mxu0 0
        %722 = vmatprep.subr.bf16.mxu0 0
        %723 = vmatpush1.bf16.msra.mxu0 0
        %724 = vmatprep.subr.bf16.mxu0 0
        %725 = vmatpush1.bf16.msra.mxu0 0
        %726 = vmatprep.subr.bf16.mxu0 0
        %727 = vmatpush1.bf16.msra.mxu0 0
        %728 = vmatprep.subr.bf16.mxu0 0
        %729 = vmatpush1.bf16.msra.mxu0 0
        %730 = vmatprep.subr.bf16.mxu0 0
        %731 = vmatpush1.bf16.msra.mxu0 0
        %732 = vmatprep.subr.bf16.mxu0 0
        %733 = vmatpush1.bf16.msra.mxu0 %v714
        %734 = vmatprep.subr.bf16.mxu0 0
        %735 = vmatpush1.bf16.msra.mxu0 %v713
        %736 = vmatprep.subr.bf16.mxu0 0
        %737 = vmatpush2.bf16.msra.mxu0 0
        %738 = vmatprep.subr.bf16.mxu0 0
        %739 = vmatpush2.bf16.msra.mxu0 0
        %740 = vmatprep.subr.bf16.mxu0 0
        %741 = vmatpush2.bf16.msra.mxu0 0
        %742 = vmatprep.subr.bf16.mxu0 0
        %743 = vmatpush2.bf16.msra.mxu0 0
        %744 = vmatprep.subr.bf16.mxu0 0
        %745 = vmatpush2.bf16.msra.mxu0 0
        %746 = vmatprep.subr.bf16.mxu0 0
        %747 = vmatpush2.bf16.msra.mxu0 0
        %748 = vmatprep.subr.bf16.mxu0 0
        %749 = vmatpush2.bf16.msra.mxu0 0
        %750 = vmatprep.subr.bf16.mxu0 0
        %751 = vmatpush2.bf16.msra.mxu0 0
        %752 = vmatprep.mubr.bf16.mxu0 0
        %753 = vmatmul.mubr.bf16.gmra.mxu0 %v718
        %v754 = vpop.f32.mrf.mxu0
        %v755 = vadd.f32 %v704, %v754
        %v756 = vpop.f32.mrf.mxu0
        %v757 = vpop.f32.mrf.mxu0
        %v758 = vpop.f32.mrf.mxu0
        %759 = vdwg.mxu0
        %v760 = vld [vmem:[%s10] sm:$0xf]
        %v761 = vld [vmem:[%s10 + $0x4] sm:$0xf]
        %v762 = vld [vmem:[%s10 + $0x8] sm:$0xf]
        %v763 = vld [vmem:[%s10 + $0xc] sm:$0xf]
        %v768 = vunpack.c.l.b16 %v760
        %v769 = vunpack.c.l.b16 %v761
        %v770 = vunpack.c.l.b16 %v762
        %v771 = vunpack.c.l.b16 %v763
        %v772 = vpack.c.b16 %v769, %v768
        %v773 = vpack.c.b16 %v771, %v770
        %776 = vmatprep.subr.bf16.mxu0 0
        %777 = vmatpush1.bf16.msra.mxu0 0
        %778 = vmatprep.subr.bf16.mxu0 0
        %779 = vmatpush1.bf16.msra.mxu0 0
        %780 = vmatprep.subr.bf16.mxu0 0
        %781 = vmatpush1.bf16.msra.mxu0 0
        %782 = vmatprep.subr.bf16.mxu0 0
        %783 = vmatpush1.bf16.msra.mxu0 0
        %784 = vmatprep.subr.bf16.mxu0 0
        %785 = vmatpush1.bf16.msra.mxu0 0
        %786 = vmatprep.subr.bf16.mxu0 0
        %787 = vmatpush1.bf16.msra.mxu0 0
        %788 = vmatprep.subr.bf16.mxu0 0
        %789 = vmatpush1.bf16.msra.mxu0 %v773
        %790 = vmatprep.subr.bf16.mxu0 0
        %791 = vmatpush1.bf16.msra.mxu0 %v772
        %792 = vmatprep.subr.bf16.mxu0 0
        %793 = vmatpush2.bf16.msra.mxu0 0
        %794 = vmatprep.subr.bf16.mxu0 0
        %795 = vmatpush2.bf16.msra.mxu0 0
        %796 = vmatprep.subr.bf16.mxu0 0
        %797 = vmatpush2.bf16.msra.mxu0 0
        %798 = vmatprep.subr.bf16.mxu0 0
        %799 = vmatpush2.bf16.msra.mxu0 0
        %800 = vmatprep.subr.bf16.mxu0 0
        %801 = vmatpush2.bf16.msra.mxu0 0
        %802 = vmatprep.subr.bf16.mxu0 0
        %803 = vmatpush2.bf16.msra.mxu0 0
        %804 = vmatprep.subr.bf16.mxu0 0
        %805 = vmatpush2.bf16.msra.mxu0 0
        %806 = vmatprep.subr.bf16.mxu0 0
        %807 = vmatpush2.bf16.msra.mxu0 0
        %808 = vmatprep.mubr.bf16.mxu0 0
        %809 = vmatmul.mubr.bf16.gmra.mxu0 %v718
        %v810 = vpop.f32.mrf.mxu0
        %v811 = vadd.f32 0.0, %v810
        %v812 = vpop.f32.mrf.mxu0
        %v813 = vpop.f32.mrf.mxu0
        %v814 = vpop.f32.mrf.mxu0
        %815 = vdwg.mxu0
        %v816 = vmul.f32 %v692, 0.35355338
        %v817 = vpack.c.bf16 %v816, %v816
        %v818 = vpack.c.bf16 %v755, %v755
        %v819 = vpack.c.bf16 %v811, %v811
        %vm820 = vcmask 64512
        %v822 = vsel %vm820, %v817, 0
        %v825 = vsel %vm820, %v818, 0
        %827 = vmatprep.subr.bf16.mxu0 0
        %828 = vmatpush1.bf16.xpose.msra.mxu0 0
        %829 = vmatprep.subr.bf16.mxu0 0
        %830 = vmatpush1.bf16.xpose.msra.mxu0 0
        %831 = vmatprep.subr.bf16.mxu0 0
        %832 = vmatpush1.bf16.xpose.msra.mxu0 0
        %833 = vmatprep.subr.bf16.mxu0 0
        %834 = vmatpush1.bf16.xpose.msra.mxu0 0
        %835 = vmatprep.subr.bf16.mxu0 0
        %836 = vmatpush1.bf16.xpose.msra.mxu0 0
        %837 = vmatprep.subr.bf16.mxu0 0
        %838 = vmatpush1.bf16.xpose.msra.mxu0 0
        %839 = vmatprep.subr.bf16.mxu0 0
        %840 = vmatpush1.bf16.xpose.msra.mxu0 0
        %841 = vmatprep.subr.bf16.mxu0 0
        %842 = vmatpush1.bf16.xpose.msra.mxu0 %v825
        %843 = vmatprep.subr.bf16.mxu0 0
        %844 = vmatpush2.bf16.xpose.msra.mxu0 0
        %845 = vmatprep.subr.bf16.mxu0 0
        %846 = vmatpush2.bf16.xpose.msra.mxu0 0
        %847 = vmatprep.subr.bf16.mxu0 0
        %848 = vmatpush2.bf16.xpose.msra.mxu0 0
        %849 = vmatprep.subr.bf16.mxu0 0
        %850 = vmatpush2.bf16.xpose.msra.mxu0 0
        %851 = vmatprep.subr.bf16.mxu0 0
        %852 = vmatpush2.bf16.xpose.msra.mxu0 0
        %853 = vmatprep.subr.bf16.mxu0 0
        %854 = vmatpush2.bf16.xpose.msra.mxu0 0
        %855 = vmatprep.subr.bf16.mxu0 0
        %856 = vmatpush2.bf16.xpose.msra.mxu0 0
        %857 = vmatprep.subr.bf16.mxu0 0
        %858 = vmatpush2.bf16.xpose.msra.mxu0 0
        %859 = vmatprep.mubr.bf16.mxu0 0
        %860 = vmatmul.mubr.bf16.gmra.mxu0 %v822
        %v861 = vpop.f32.mrf.mxu0
        %v862 = vadd.f32 0.0, %v861
        %v863 = vpop.f32.mrf.mxu0
        %v864 = vpop.f32.mrf.mxu0
        %v865 = vpop.f32.mrf.mxu0
        %866 = vdwg.mxu0
        %v867 = vsel %vm633, %v862, -9e+15
        %v868 = vadd.f32 %v867, %v632
        %v869 = vsel %vm820, %v868, -inf
        %870 = vmax.xlane.f32.xlu0 %v869
        %v871 = vpop.xlane.xlu0 %870
        %v872 = vsub.f32 %v868, %v871
        %v873 = vmul.f32 %v872, 1.442695
        %v874 = vpow.pop %v873
        %v875 = vsel %vm820, %v874, 0.0
        %876 = vadd.xlane.f32.xlu0 %v875
        %v877 = vpop.xlane.xlu0 %876
        %v878 = vrcp.pop %v877
        %v879 = vmul.f32 %v874, %v878
        %v880 = vpack.c.bf16 %v879, %v879
        %v882 = vsel %vm820, %v880, 0
        %vm884 = vcmask 1043456
        %v886 = vsel %vm884, %v819, 0
        %888 = vmatprep.subr.bf16.mxu0 0
        %889 = vmatpush1.bf16.msra.mxu0 0
        %890 = vmatprep.subr.bf16.mxu0 0
        %891 = vmatpush1.bf16.msra.mxu0 0
        %892 = vmatprep.subr.bf16.mxu0 0
        %893 = vmatpush1.bf16.msra.mxu0 0
        %894 = vmatprep.subr.bf16.mxu0 0
        %895 = vmatpush1.bf16.msra.mxu0 0
        %896 = vmatprep.subr.bf16.mxu0 0
        %897 = vmatpush1.bf16.msra.mxu0 0
        %898 = vmatprep.subr.bf16.mxu0 0
        %899 = vmatpush1.bf16.msra.mxu0 0
        %900 = vmatprep.subr.bf16.mxu0 0
        %901 = vmatpush1.bf16.msra.mxu0 0
        %902 = vmatprep.subr.bf16.mxu0 0
        %903 = vmatpush1.bf16.msra.mxu0 %v886
        %904 = vmatprep.subr.bf16.mxu0 0
        %905 = vmatpush2.bf16.msra.mxu0 0
        %906 = vmatprep.subr.bf16.mxu0 0
        %907 = vmatpush2.bf16.msra.mxu0 0
        %908 = vmatprep.subr.bf16.mxu0 0
        %909 = vmatpush2.bf16.msra.mxu0 0
        %910 = vmatprep.subr.bf16.mxu0 0
        %911 = vmatpush2.bf16.msra.mxu0 0
        %912 = vmatprep.subr.bf16.mxu0 0
        %913 = vmatpush2.bf16.msra.mxu0 0
        %914 = vmatprep.subr.bf16.mxu0 0
        %915 = vmatpush2.bf16.msra.mxu0 0
        %916 = vmatprep.subr.bf16.mxu0 0
        %917 = vmatpush2.bf16.msra.mxu0 0
        %918 = vmatprep.subr.bf16.mxu0 0
        %919 = vmatpush2.bf16.msra.mxu0 0
        %920 = vmatprep.mubr.bf16.mxu0 0
        %921 = vmatmul.mubr.bf16.gmra.mxu0 %v882
        %v922 = vpop.f32.mrf.mxu0
        %v923 = vadd.f32 0.0, %v922
        %v924 = vpop.f32.mrf.mxu0
        %v925 = vpop.f32.mrf.mxu0
        %v926 = vpop.f32.mrf.mxu0
        %927 = vdwg.mxu0
        %929 = vrot.lane.b32.xlu0 %v817, 120
        %v930 = vpop.permute.xlu0 %929
        %932 = vrot.lane.b32.xlu0 %v818, 120
        %v933 = vpop.permute.xlu0 %932
        %v935 = vsel %vm820, %v930, 0
        %v938 = vsel %vm820, %v933, 0
        %940 = vmatprep.subr.bf16.mxu0 0
        %941 = vmatpush1.bf16.xpose.msra.mxu0 0
        %942 = vmatprep.subr.bf16.mxu0 0
        %943 = vmatpush1.bf16.xpose.msra.mxu0 0
        %944 = vmatprep.subr.bf16.mxu0 0
        %945 = vmatpush1.bf16.xpose.msra.mxu0 0
        %946 = vmatprep.subr.bf16.mxu0 0
        %947 = vmatpush1.bf16.xpose.msra.mxu0 0
        %948 = vmatprep.subr.bf16.mxu0 0
        %949 = vmatpush1.bf16.xpose.msra.mxu0 0
        %950 = vmatprep.subr.bf16.mxu0 0
        %951 = vmatpush1.bf16.xpose.msra.mxu0 0
        %952 = vmatprep.subr.bf16.mxu0 0
        %953 = vmatpush1.bf16.xpose.msra.mxu0 0
        %954 = vmatprep.subr.bf16.mxu0 0
        %955 = vmatpush1.bf16.xpose.msra.mxu0 %v938
        %956 = vmatprep.subr.bf16.mxu0 0
        %957 = vmatpush2.bf16.xpose.msra.mxu0 0
        %958 = vmatprep.subr.bf16.mxu0 0
        %959 = vmatpush2.bf16.xpose.msra.mxu0 0
        %960 = vmatprep.subr.bf16.mxu0 0
        %961 = vmatpush2.bf16.xpose.msra.mxu0 0
        %962 = vmatprep.subr.bf16.mxu0 0
        %963 = vmatpush2.bf16.xpose.msra.mxu0 0
        %964 = vmatprep.subr.bf16.mxu0 0
        %965 = vmatpush2.bf16.xpose.msra.mxu0 0
        %966 = vmatprep.subr.bf16.mxu0 0
        %967 = vmatpush2.bf16.xpose.msra.mxu0 0
        %968 = vmatprep.subr.bf16.mxu0 0
        %969 = vmatpush2.bf16.xpose.msra.mxu0 0
        %970 = vmatprep.subr.bf16.mxu0 0
        %971 = vmatpush2.bf16.xpose.msra.mxu0 0
        %972 = vmatprep.mubr.bf16.mxu0 0
        %973 = vmatmul.mubr.bf16.gmra.mxu0 %v935
        %v974 = vpop.f32.mrf.mxu0
        %v975 = vadd.f32 0.0, %v974
        %v976 = vpop.f32.mrf.mxu0
        %v977 = vpop.f32.mrf.mxu0
        %v978 = vpop.f32.mrf.mxu0
        %979 = vdwg.mxu0
        %v980 = vsel %vm633, %v975, -9e+15
        %v981 = vadd.f32 %v980, %v632
        %v982 = vsel %vm820, %v981, -inf
        %983 = vmax.xlane.f32.xlu0 %v982
        %v984 = vpop.xlane.xlu0 %983
        %v985 = vsub.f32 %v981, %v984
        %v986 = vmul.f32 %v985, 1.442695
        %v987 = vpow.pop %v986
        %v988 = vsel %vm820, %v987, 0.0
        %989 = vadd.xlane.f32.xlu0 %v988
        %v990 = vpop.xlane.xlu0 %989
        %v991 = vrcp.pop %v990
        %v992 = vmul.f32 %v987, %v991
        %v993 = vpack.c.bf16 %v992, %v992
        %995 = vrot.lane.b32.xlu0 %v819, 120
        %v996 = vpop.permute.xlu0 %995
        %v998 = vsel %vm820, %v993, 0
        %v1001 = vsel %vm884, %v996, 0
        %1003 = vmatprep.subr.bf16.mxu0 0
        %1004 = vmatpush1.bf16.msra.mxu0 0
        %1005 = vmatprep.subr.bf16.mxu0 0
        %1006 = vmatpush1.bf16.msra.mxu0 0
        %1007 = vmatprep.subr.bf16.mxu0 0
        %1008 = vmatpush1.bf16.msra.mxu0 0
        %1009 = vmatprep.subr.bf16.mxu0 0
        %1010 = vmatpush1.bf16.msra.mxu0 0
        %1011 = vmatprep.subr.bf16.mxu0 0
        %1012 = vmatpush1.bf16.msra.mxu0 0
        %1013 = vmatprep.subr.bf16.mxu0 0
        %1014 = vmatpush1.bf16.msra.mxu0 0
        %1015 = vmatprep.subr.bf16.mxu0 0
        %1016 = vmatpush1.bf16.msra.mxu0 0
        %1017 = vmatprep.subr.bf16.mxu0 0
        %1018 = vmatpush1.bf16.msra.mxu0 %v1001
        %1019 = vmatprep.subr.bf16.mxu0 0
        %1020 = vmatpush2.bf16.msra.mxu0 0
        %1021 = vmatprep.subr.bf16.mxu0 0
        %1022 = vmatpush2.bf16.msra.mxu0 0
        %1023 = vmatprep.subr.bf16.mxu0 0
        %1024 = vmatpush2.bf16.msra.mxu0 0
        %1025 = vmatprep.subr.bf16.mxu0 0
        %1026 = vmatpush2.bf16.msra.mxu0 0
        %1027 = vmatprep.subr.bf16.mxu0 0
        %1028 = vmatpush2.bf16.msra.mxu0 0
        %1029 = vmatprep.subr.bf16.mxu0 0
        %1030 = vmatpush2.bf16.msra.mxu0 0
        %1031 = vmatprep.subr.bf16.mxu0 0
        %1032 = vmatpush2.bf16.msra.mxu0 0
        %1033 = vmatprep.subr.bf16.mxu0 0
        %1034 = vmatpush2.bf16.msra.mxu0 0
        %1035 = vmatprep.mubr.bf16.mxu0 0
        %1036 = vmatmul.mubr.bf16.gmra.mxu0 %v998
        %v1037 = vpop.f32.mrf.mxu0
        %v1038 = vadd.f32 0.0, %v1037
        %v1039 = vpop.f32.mrf.mxu0
        %v1040 = vpop.f32.mrf.mxu0
        %v1041 = vpop.f32.mrf.mxu0
        %1042 = vdwg.mxu0
        %1043 = vrot.lane.b32.xlu0 %v817, 112
        %v1044 = vpop.permute.xlu0 %1043
        %1045 = vrot.lane.b32.xlu0 %v818, 112
        %v1046 = vpop.permute.xlu0 %1045
        %v1048 = vsel %vm820, %v1044, 0
        %v1051 = vsel %vm820, %v1046, 0
        %1053 = vmatprep.subr.bf16.mxu0 0
        %1054 = vmatpush1.bf16.xpose.msra.mxu0 0
        %1055 = vmatprep.subr.bf16.mxu0 0
        %1056 = vmatpush1.bf16.xpose.msra.mxu0 0
        %1057 = vmatprep.subr.bf16.mxu0 0
        %1058 = vmatpush1.bf16.xpose.msra.mxu0 0
        %1059 = vmatprep.subr.bf16.mxu0 0
        %1060 = vmatpush1.bf16.xpose.msra.mxu0 0
        %1061 = vmatprep.subr.bf16.mxu0 0
        %1062 = vmatpush1.bf16.xpose.msra.mxu0 0
        %1063 = vmatprep.subr.bf16.mxu0 0
        %1064 = vmatpush1.bf16.xpose.msra.mxu0 0
        %1065 = vmatprep.subr.bf16.mxu0 0
        %1066 = vmatpush1.bf16.xpose.msra.mxu0 0
        %1067 = vmatprep.subr.bf16.mxu0 0
        %1068 = vmatpush1.bf16.xpose.msra.mxu0 %v1051
        %1069 = vmatprep.subr.bf16.mxu0 0
        %1070 = vmatpush2.bf16.xpose.msra.mxu0 0
        %1071 = vmatprep.subr.bf16.mxu0 0
        %1072 = vmatpush2.bf16.xpose.msra.mxu0 0
        %1073 = vmatprep.subr.bf16.mxu0 0
        %1074 = vmatpush2.bf16.xpose.msra.mxu0 0
        %1075 = vmatprep.subr.bf16.mxu0 0
        %1076 = vmatpush2.bf16.xpose.msra.mxu0 0
        %1077 = vmatprep.subr.bf16.mxu0 0
        %1078 = vmatpush2.bf16.xpose.msra.mxu0 0
        %1079 = vmatprep.subr.bf16.mxu0 0
        %1080 = vmatpush2.bf16.xpose.msra.mxu0 0
        %1081 = vmatprep.subr.bf16.mxu0 0
        %1082 = vmatpush2.bf16.xpose.msra.mxu0 0
        %1083 = vmatprep.subr.bf16.mxu0 0
        %1084 = vmatpush2.bf16.xpose.msra.mxu0 0
        %1085 = vmatprep.mubr.bf16.mxu0 0
        %1086 = vmatmul.mubr.bf16.gmra.mxu0 %v1048
        %v1087 = vpop.f32.mrf.mxu0
        %v1088 = vadd.f32 0.0, %v1087
        %v1089 = vpop.f32.mrf.mxu0
        %v1090 = vpop.f32.mrf.mxu0
        %v1091 = vpop.f32.mrf.mxu0
        %1092 = vdwg.mxu0
        %v1093 = vsel %vm633, %v1088, -9e+15
        %v1094 = vadd.f32 %v1093, %v632
        %v1095 = vsel %vm820, %v1094, -inf
        %1096 = vmax.xlane.f32.xlu0 %v1095
        %v1097 = vpop.xlane.xlu0 %1096
        %v1098 = vsub.f32 %v1094, %v1097
        %v1099 = vmul.f32 %v1098, 1.442695
        %v1100 = vpow.pop %v1099
        %v1101 = vsel %vm820, %v1100, 0.0
        %1102 = vadd.xlane.f32.xlu0 %v1101
        %v1103 = vpop.xlane.xlu0 %1102
        %v1104 = vrcp.pop %v1103
        %v1105 = vmul.f32 %v1100, %v1104
        %v1106 = vpack.c.bf16 %v1105, %v1105
        %1107 = vrot.lane.b32.xlu0 %v819, 112
        %v1108 = vpop.permute.xlu0 %1107
        %v1110 = vsel %vm820, %v1106, 0
        %v1113 = vsel %vm884, %v1108, 0
        %1115 = vmatprep.subr.bf16.mxu0 0
        %1116 = vmatpush1.bf16.msra.mxu0 0
        %1117 = vmatprep.subr.bf16.mxu0 0
        %1118 = vmatpush1.bf16.msra.mxu0 0
        %1119 = vmatprep.subr.bf16.mxu0 0
        %1120 = vmatpush1.bf16.msra.mxu0 0
        %1121 = vmatprep.subr.bf16.mxu0 0
        %1122 = vmatpush1.bf16.msra.mxu0 0
        %1123 = vmatprep.subr.bf16.mxu0 0
        %1124 = vmatpush1.bf16.msra.mxu0 0
        %1125 = vmatprep.subr.bf16.mxu0 0
        %1126 = vmatpush1.bf16.msra.mxu0 0
        %1127 = vmatprep.subr.bf16.mxu0 0
        %1128 = vmatpush1.bf16.msra.mxu0 0
        %1129 = vmatprep.subr.bf16.mxu0 0
        %1130 = vmatpush1.bf16.msra.mxu0 %v1113
        %1131 = vmatprep.subr.bf16.mxu0 0
        %1132 = vmatpush2.bf16.msra.mxu0 0
        %1133 = vmatprep.subr.bf16.mxu0 0
        %1134 = vmatpush2.bf16.msra.mxu0 0
        %1135 = vmatprep.subr.bf16.mxu0 0
        %1136 = vmatpush2.bf16.msra.mxu0 0
        %1137 = vmatprep.subr.bf16.mxu0 0
        %1138 = vmatpush2.bf16.msra.mxu0 0
        %1139 = vmatprep.subr.bf16.mxu0 0
        %1140 = vmatpush2.bf16.msra.mxu0 0
        %1141 = vmatprep.subr.bf16.mxu0 0
        %1142 = vmatpush2.bf16.msra.mxu0 0
        %1143 = vmatprep.subr.bf16.mxu0 0
        %1144 = vmatpush2.bf16.msra.mxu0 0
        %1145 = vmatprep.subr.bf16.mxu0 0
        %1146 = vmatpush2.bf16.msra.mxu0 0
        %1147 = vmatprep.mubr.bf16.mxu0 0
        %1148 = vmatmul.mubr.bf16.gmra.mxu0 %v1110
        %v1149 = vpop.f32.mrf.mxu0
        %v1150 = vadd.f32 0.0, %v1149
        %v1151 = vpop.f32.mrf.mxu0
        %v1152 = vpop.f32.mrf.mxu0
        %v1153 = vpop.f32.mrf.mxu0
        %1154 = vdwg.mxu0
        %1155 = vrot.lane.b32.xlu0 %v817, 104
        %v1156 = vpop.permute.xlu0 %1155
        %1157 = vrot.lane.b32.xlu0 %v818, 104
        %v1158 = vpop.permute.xlu0 %1157
        %v1160 = vsel %vm820, %v1156, 0
        %v1163 = vsel %vm820, %v1158, 0
        %1165 = vmatprep.subr.bf16.mxu0 0
        %1166 = vmatpush1.bf16.xpose.msra.mxu0 0
        %1167 = vmatprep.subr.bf16.mxu0 0
        %1168 = vmatpush1.bf16.xpose.msra.mxu0 0
        %1169 = vmatprep.subr.bf16.mxu0 0
        %1170 = vmatpush1.bf16.xpose.msra.mxu0 0
        %1171 = vmatprep.subr.bf16.mxu0 0
        %1172 = vmatpush1.bf16.xpose.msra.mxu0 0
        %1173 = vmatprep.subr.bf16.mxu0 0
        %1174 = vmatpush1.bf16.xpose.msra.mxu0 0
        %1175 = vmatprep.subr.bf16.mxu0 0
        %1176 = vmatpush1.bf16.xpose.msra.mxu0 0
        %1177 = vmatprep.subr.bf16.mxu0 0
        %1178 = vmatpush1.bf16.xpose.msra.mxu0 0
        %1179 = vmatprep.subr.bf16.mxu0 0
        %1180 = vmatpush1.bf16.xpose.msra.mxu0 %v1163
        %1181 = vmatprep.subr.bf16.mxu0 0
        %1182 = vmatpush2.bf16.xpose.msra.mxu0 0
        %1183 = vmatprep.subr.bf16.mxu0 0
        %1184 = vmatpush2.bf16.xpose.msra.mxu0 0
        %1185 = vmatprep.subr.bf16.mxu0 0
        %1186 = vmatpush2.bf16.xpose.msra.mxu0 0
        %1187 = vmatprep.subr.bf16.mxu0 0
        %1188 = vmatpush2.bf16.xpose.msra.mxu0 0
        %1189 = vmatprep.subr.bf16.mxu0 0
        %1190 = vmatpush2.bf16.xpose.msra.mxu0 0
        %1191 = vmatprep.subr.bf16.mxu0 0
        %1192 = vmatpush2.bf16.xpose.msra.mxu0 0
        %1193 = vmatprep.subr.bf16.mxu0 0
        %1194 = vmatpush2.bf16.xpose.msra.mxu0 0
        %1195 = vmatprep.subr.bf16.mxu0 0
        %1196 = vmatpush2.bf16.xpose.msra.mxu0 0
        %1197 = vmatprep.mubr.bf16.mxu0 0
        %1198 = vmatmul.mubr.bf16.gmra.mxu0 %v1160
        %v1199 = vpop.f32.mrf.mxu0
        %v1200 = vadd.f32 0.0, %v1199
        %v1201 = vpop.f32.mrf.mxu0
        %v1202 = vpop.f32.mrf.mxu0
        %v1203 = vpop.f32.mrf.mxu0
        %1204 = vdwg.mxu0
        %v1205 = vsel %vm633, %v1200, -9e+15
        %v1206 = vadd.f32 %v1205, %v632
        %v1207 = vsel %vm820, %v1206, -inf
        %1208 = vmax.xlane.f32.xlu0 %v1207
        %v1209 = vpop.xlane.xlu0 %1208
        %v1210 = vsub.f32 %v1206, %v1209
        %v1211 = vmul.f32 %v1210, 1.442695
        %v1212 = vpow.pop %v1211
        %v1213 = vsel %vm820, %v1212, 0.0
        %1214 = vadd.xlane.f32.xlu0 %v1213
        %v1215 = vpop.xlane.xlu0 %1214
        %v1216 = vrcp.pop %v1215
        %v1217 = vmul.f32 %v1212, %v1216
        %v1218 = vpack.c.bf16 %v1217, %v1217
        %1219 = vrot.lane.b32.xlu0 %v819, 104
        %v1220 = vpop.permute.xlu0 %1219
        %v1222 = vsel %vm820, %v1218, 0
        %v1225 = vsel %vm884, %v1220, 0
        %1227 = vmatprep.subr.bf16.mxu0 0
        %1228 = vmatpush1.bf16.msra.mxu0 0
        %1229 = vmatprep.subr.bf16.mxu0 0
        %1230 = vmatpush1.bf16.msra.mxu0 0
        %1231 = vmatprep.subr.bf16.mxu0 0
        %1232 = vmatpush1.bf16.msra.mxu0 0
        %1233 = vmatprep.subr.bf16.mxu0 0
        %1234 = vmatpush1.bf16.msra.mxu0 0
        %1235 = vmatprep.subr.bf16.mxu0 0
        %1236 = vmatpush1.bf16.msra.mxu0 0
        %1237 = vmatprep.subr.bf16.mxu0 0
        %1238 = vmatpush1.bf16.msra.mxu0 0
        %1239 = vmatprep.subr.bf16.mxu0 0
        %1240 = vmatpush1.bf16.msra.mxu0 0
        %1241 = vmatprep.subr.bf16.mxu0 0
        %1242 = vmatpush1.bf16.msra.mxu0 %v1225
        %1243 = vmatprep.subr.bf16.mxu0 0
        %1244 = vmatpush2.bf16.msra.mxu0 0
        %1245 = vmatprep.subr.bf16.mxu0 0
        %1246 = vmatpush2.bf16.msra.mxu0 0
        %1247 = vmatprep.subr.bf16.mxu0 0
        %1248 = vmatpush2.bf16.msra.mxu0 0
        %1249 = vmatprep.subr.bf16.mxu0 0
        %1250 = vmatpush2.bf16.msra.mxu0 0
        %1251 = vmatprep.subr.bf16.mxu0 0
        %1252 = vmatpush2.bf16.msra.mxu0 0
        %1253 = vmatprep.subr.bf16.mxu0 0
        %1254 = vmatpush2.bf16.msra.mxu0 0
        %1255 = vmatprep.subr.bf16.mxu0 0
        %1256 = vmatpush2.bf16.msra.mxu0 0
        %1257 = vmatprep.subr.bf16.mxu0 0
        %1258 = vmatpush2.bf16.msra.mxu0 0
        %1259 = vmatprep.mubr.bf16.mxu0 0
        %1260 = vmatmul.mubr.bf16.gmra.mxu0 %v1222
        %v1261 = vpop.f32.mrf.mxu0
        %v1262 = vadd.f32 0.0, %v1261
        %v1263 = vpop.f32.mrf.mxu0
        %v1264 = vpop.f32.mrf.mxu0
        %v1265 = vpop.f32.mrf.mxu0
        %1266 = vdwg.mxu0
        %1268 = vrot.lane.b32.xlu0 %v1038, 8
        %v1269 = vpop.permute.xlu0 %1268
        %1272 = vrot.lane.b32.xlu0 %v1150, 16
        %v1273 = vpop.permute.xlu0 %1272
        %1276 = vrot.lane.b32.xlu0 %v1262, 24
        %v1277 = vpop.permute.xlu0 %1276
        %v1279 = vsel %vm820, %v923, %v1269
        %vm1280 = vcmask 130048
        %v1281 = vsel %vm1280, %v1279, %v1273
        %vm1282 = vcmask 195584
        %v1283 = vsel %vm1282, %v1281, %v1277
        %v1284 = vadd.f32 %v577, %v1283
        %s1285 = scalar_lea.vmem %s504, 8
        %v1286 = vld [vmem:[%s1285] sm:$0xff]
        %s1287 = scalar_lea.vmem %s512, 8
        %v1288 = vld [vmem:[%s1287] sm:$0xff]
        %vm1289 = vcmp.gt.f32.partialorder %v1286, 0.0
        %s1290 = scalar_lea.vmem %s6, 16
        %v1291 = vld [vmem:[%s1290] sm:$0xf]
        %v1292 = vld [vmem:[%s1290 + $0x4] sm:$0xf]
        %v1293 = vld [vmem:[%s1290 + $0x8] sm:$0xf]
        %v1294 = vld [vmem:[%s1290 + $0xc] sm:$0xf]
        %v1295 = vlaneseq
        %v1296 = vshrl.u32 %v1295, 7
        %v1297 = vsub.s32 1, %v1296
        %v1298 = vrot.slane %v628, %v1297
        %v1303 = vunpack.c.l.b16 %v1291
        %v1304 = vunpack.c.l.b16 %v1292
        %v1305 = vunpack.c.l.b16 %v1293
        %v1306 = vunpack.c.l.b16 %v1294
        %v1307 = vpack.c.b16 %v1304, %v1303
        %v1308 = vpack.c.b16 %v1306, %v1305
        %1311 = vmatprep.subr.bf16.mxu0 0
        %1312 = vmatpush1.bf16.msra.mxu0 0
        %1313 = vmatprep.subr.bf16.mxu0 0
        %1314 = vmatpush1.bf16.msra.mxu0 0
        %1315 = vmatprep.subr.bf16.mxu0 0
        %1316 = vmatpush1.bf16.msra.mxu0 0
        %1317 = vmatprep.subr.bf16.mxu0 0
        %1318 = vmatpush1.bf16.msra.mxu0 0
        %1319 = vmatprep.subr.bf16.mxu0 0
        %1320 = vmatpush1.bf16.msra.mxu0 0
        %1321 = vmatprep.subr.bf16.mxu0 0
        %1322 = vmatpush1.bf16.msra.mxu0 0
        %1323 = vmatprep.subr.bf16.mxu0 0
        %1324 = vmatpush1.bf16.msra.mxu0 %v1308
        %1325 = vmatprep.subr.bf16.mxu0 0
        %1326 = vmatpush1.bf16.msra.mxu0 %v1307
        %1327 = vmatprep.subr.bf16.mxu0 0
        %1328 = vmatpush2.bf16.msra.mxu0 0
        %1329 = vmatprep.subr.bf16.mxu0 0
        %1330 = vmatpush2.bf16.msra.mxu0 0
        %1331 = vmatprep.subr.bf16.mxu0 0
        %1332 = vmatpush2.bf16.msra.mxu0 0
        %1333 = vmatprep.subr.bf16.mxu0 0
        %1334 = vmatpush2.bf16.msra.mxu0 0
        %1335 = vmatprep.subr.bf16.mxu0 0
        %1336 = vmatpush2.bf16.msra.mxu0 0
        %1337 = vmatprep.subr.bf16.mxu0 0
        %1338 = vmatpush2.bf16.msra.mxu0 0
        %1339 = vmatprep.subr.bf16.mxu0 0
        %1340 = vmatpush2.bf16.msra.mxu0 0
        %1341 = vmatprep.subr.bf16.mxu0 0
        %1342 = vmatpush2.bf16.msra.mxu0 0
        %1343 = vmatprep.mubr.bf16.mxu0 0
        %1344 = vmatmul.mubr.bf16.gmra.mxu0 %v655
        %v1345 = vpop.f32.mrf.mxu0
        %v1346 = vadd.f32 %v1298, %v1345
        %v1347 = vpop.f32.mrf.mxu0
        %v1348 = vpop.f32.mrf.mxu0
        %v1349 = vpop.f32.mrf.mxu0
        %1350 = vdwg.mxu0
        %s1351 = scalar_lea.vmem %s8, 16
        %v1352 = vld [vmem:[%s1351] sm:$0xf]
        %v1353 = vld [vmem:[%s1351 + $0x4] sm:$0xf]
        %v1354 = vld [vmem:[%s1351 + $0x8] sm:$0xf]
        %v1355 = vld [vmem:[%s1351 + $0xc] sm:$0xf]
        %v1356 = vlaneseq
        %v1357 = vshrl.u32 %v1356, 7
        %v1358 = vsub.s32 1, %v1357
        %v1359 = vrot.slane %v629, %v1358
        %v1364 = vunpack.c.l.b16 %v1352
        %v1365 = vunpack.c.l.b16 %v1353
        %v1366 = vunpack.c.l.b16 %v1354
        %v1367 = vunpack.c.l.b16 %v1355
        %v1368 = vpack.c.b16 %v1365, %v1364
        %v1369 = vpack.c.b16 %v1367, %v1366
        %1372 = vmatprep.subr.bf16.mxu0 0
        %1373 = vmatpush1.bf16.msra.mxu0 0
        %1374 = vmatprep.subr.bf16.mxu0 0
        %1375 = vmatpush1.bf16.msra.mxu0 0
        %1376 = vmatprep.subr.bf16.mxu0 0
        %1377 = vmatpush1.bf16.msra.mxu0 0
        %1378 = vmatprep.subr.bf16.mxu0 0
        %1379 = vmatpush1.bf16.msra.mxu0 0
        %1380 = vmatprep.subr.bf16.mxu0 0
        %1381 = vmatpush1.bf16.msra.mxu0 0
        %1382 = vmatprep.subr.bf16.mxu0 0
        %1383 = vmatpush1.bf16.msra.mxu0 0
        %1384 = vmatprep.subr.bf16.mxu0 0
        %1385 = vmatpush1.bf16.msra.mxu0 %v1369
        %1386 = vmatprep.subr.bf16.mxu0 0
        %1387 = vmatpush1.bf16.msra.mxu0 %v1368
        %1388 = vmatprep.subr.bf16.mxu0 0
        %1389 = vmatpush2.bf16.msra.mxu0 0
        %1390 = vmatprep.subr.bf16.mxu0 0
        %1391 = vmatpush2.bf16.msra.mxu0 0
        %1392 = vmatprep.subr.bf16.mxu0 0
        %1393 = vmatpush2.bf16.msra.mxu0 0
        %1394 = vmatprep.subr.bf16.mxu0 0
        %1395 = vmatpush2.bf16.msra.mxu0 0
        %1396 = vmatprep.subr.bf16.mxu0 0
        %1397 = vmatpush2.bf16.msra.mxu0 0
        %1398 = vmatprep.subr.bf16.mxu0 0
        %1399 = vmatpush2.bf16.msra.mxu0 0
        %1400 = vmatprep.subr.bf16.mxu0 0
        %1401 = vmatpush2.bf16.msra.mxu0 0
        %1402 = vmatprep.subr.bf16.mxu0 0
        %1403 = vmatpush2.bf16.msra.mxu0 0
        %1404 = vmatprep.mubr.bf16.mxu0 0
        %1405 = vmatmul.mubr.bf16.gmra.mxu0 %v718
        %v1406 = vpop.f32.mrf.mxu0
        %v1407 = vadd.f32 %v1359, %v1406
        %v1408 = vpop.f32.mrf.mxu0
        %v1409 = vpop.f32.mrf.mxu0
        %v1410 = vpop.f32.mrf.mxu0
        %1411 = vdwg.mxu0
        %s1412 = scalar_lea.vmem %s10, 16
        %v1413 = vld [vmem:[%s1412] sm:$0xf]
        %v1414 = vld [vmem:[%s1412 + $0x4] sm:$0xf]
        %v1415 = vld [vmem:[%s1412 + $0x8] sm:$0xf]
        %v1416 = vld [vmem:[%s1412 + $0xc] sm:$0xf]
        %v1421 = vunpack.c.l.b16 %v1413
        %v1422 = vunpack.c.l.b16 %v1414
        %v1423 = vunpack.c.l.b16 %v1415
        %v1424 = vunpack.c.l.b16 %v1416
        %v1425 = vpack.c.b16 %v1422, %v1421
        %v1426 = vpack.c.b16 %v1424, %v1423
        %1429 = vmatprep.subr.bf16.mxu0 0
        %1430 = vmatpush1.bf16.msra.mxu0 0
        %1431 = vmatprep.subr.bf16.mxu0 0
        %1432 = vmatpush1.bf16.msra.mxu0 0
        %1433 = vmatprep.subr.bf16.mxu0 0
        %1434 = vmatpush1.bf16.msra.mxu0 0
        %1435 = vmatprep.subr.bf16.mxu0 0
        %1436 = vmatpush1.bf16.msra.mxu0 0
        %1437 = vmatprep.subr.bf16.mxu0 0
        %1438 = vmatpush1.bf16.msra.mxu0 0
        %1439 = vmatprep.subr.bf16.mxu0 0
        %1440 = vmatpush1.bf16.msra.mxu0 0
        %1441 = vmatprep.subr.bf16.mxu0 0
        %1442 = vmatpush1.bf16.msra.mxu0 %v1426
        %1443 = vmatprep.subr.bf16.mxu0 0
        %1444 = vmatpush1.bf16.msra.mxu0 %v1425
        %1445 = vmatprep.subr.bf16.mxu0 0
        %1446 = vmatpush2.bf16.msra.mxu0 0
        %1447 = vmatprep.subr.bf16.mxu0 0
        %1448 = vmatpush2.bf16.msra.mxu0 0
        %1449 = vmatprep.subr.bf16.mxu0 0
        %1450 = vmatpush2.bf16.msra.mxu0 0
        %1451 = vmatprep.subr.bf16.mxu0 0
        %1452 = vmatpush2.bf16.msra.mxu0 0
        %1453 = vmatprep.subr.bf16.mxu0 0
        %1454 = vmatpush2.bf16.msra.mxu0 0
        %1455 = vmatprep.subr.bf16.mxu0 0
        %1456 = vmatpush2.bf16.msra.mxu0 0
        %1457 = vmatprep.subr.bf16.mxu0 0
        %1458 = vmatpush2.bf16.msra.mxu0 0
        %1459 = vmatprep.subr.bf16.mxu0 0
        %1460 = vmatpush2.bf16.msra.mxu0 0
        %1461 = vmatprep.mubr.bf16.mxu0 0
        %1462 = vmatmul.mubr.bf16.gmra.mxu0 %v718
        %v1463 = vpop.f32.mrf.mxu0
        %v1464 = vadd.f32 0.0, %v1463
        %v1465 = vpop.f32.mrf.mxu0
        %v1466 = vpop.f32.mrf.mxu0
        %v1467 = vpop.f32.mrf.mxu0
        %1468 = vdwg.mxu0
        %v1469 = vmul.f32 %v1346, 0.35355338
        %v1470 = vpack.c.bf16 %v1469, %v1469
        %v1471 = vpack.c.bf16 %v1407, %v1407
        %v1472 = vpack.c.bf16 %v1464, %v1464
        %v1474 = vsel %vm820, %v1470, 0
        %v1477 = vsel %vm820, %v1471, 0
        %1479 = vmatprep.subr.bf16.mxu0 0
        %1480 = vmatpush1.bf16.xpose.msra.mxu0 0
        %1481 = vmatprep.subr.bf16.mxu0 0
        %1482 = vmatpush1.bf16.xpose.msra.mxu0 0
        %1483 = vmatprep.subr.bf16.mxu0 0
        %1484 = vmatpush1.bf16.xpose.msra.mxu0 0
        %1485 = vmatprep.subr.bf16.mxu0 0
        %1486 = vmatpush1.bf16.xpose.msra.mxu0 0
        %1487 = vmatprep.subr.bf16.mxu0 0
        %1488 = vmatpush1.bf16.xpose.msra.mxu0 0
        %1489 = vmatprep.subr.bf16.mxu0 0
        %1490 = vmatpush1.bf16.xpose.msra.mxu0 0
        %1491 = vmatprep.subr.bf16.mxu0 0
        %1492 = vmatpush1.bf16.xpose.msra.mxu0 0
        %1493 = vmatprep.subr.bf16.mxu0 0
        %1494 = vmatpush1.bf16.xpose.msra.mxu0 %v1477
        %1495 = vmatprep.subr.bf16.mxu0 0
        %1496 = vmatpush2.bf16.xpose.msra.mxu0 0
        %1497 = vmatprep.subr.bf16.mxu0 0
        %1498 = vmatpush2.bf16.xpose.msra.mxu0 0
        %1499 = vmatprep.subr.bf16.mxu0 0
        %1500 = vmatpush2.bf16.xpose.msra.mxu0 0
        %1501 = vmatprep.subr.bf16.mxu0 0
        %1502 = vmatpush2.bf16.xpose.msra.mxu0 0
        %1503 = vmatprep.subr.bf16.mxu0 0
        %1504 = vmatpush2.bf16.xpose.msra.mxu0 0
        %1505 = vmatprep.subr.bf16.mxu0 0
        %1506 = vmatpush2.bf16.xpose.msra.mxu0 0
        %1507 = vmatprep.subr.bf16.mxu0 0
        %1508 = vmatpush2.bf16.xpose.msra.mxu0 0
        %1509 = vmatprep.subr.bf16.mxu0 0
        %1510 = vmatpush2.bf16.xpose.msra.mxu0 0
        %1511 = vmatprep.mubr.bf16.mxu0 0
        %1512 = vmatmul.mubr.bf16.gmra.mxu0 %v1474
        %v1513 = vpop.f32.mrf.mxu0
        %v1514 = vadd.f32 0.0, %v1513
        %v1515 = vpop.f32.mrf.mxu0
        %v1516 = vpop.f32.mrf.mxu0
        %v1517 = vpop.f32.mrf.mxu0
        %1518 = vdwg.mxu0
        %v1519 = vsel %vm1289, %v1514, -9e+15
        %v1520 = vadd.f32 %v1519, %v1288
        %v1521 = vsel %vm820, %v1520, -inf
        %1522 = vmax.xlane.f32.xlu0 %v1521
        %v1523 = vpop.xlane.xlu0 %1522
        %v1524 = vsub.f32 %v1520, %v1523
        %v1525 = vmul.f32 %v1524, 1.442695
        %v1526 = vpow.pop %v1525
        %v1527 = vsel %vm820, %v1526, 0.0
        %1528 = vadd.xlane.f32.xlu0 %v1527
        %v1529 = vpop.xlane.xlu0 %1528
        %v1530 = vrcp.pop %v1529
        %v1531 = vmul.f32 %v1526, %v1530
        %v1532 = vpack.c.bf16 %v1531, %v1531
        %v1534 = vsel %vm820, %v1532, 0
        %v1537 = vsel %vm884, %v1472, 0
        %1539 = vmatprep.subr.bf16.mxu0 0
        %1540 = vmatpush1.bf16.msra.mxu0 0
        %1541 = vmatprep.subr.bf16.mxu0 0
        %1542 = vmatpush1.bf16.msra.mxu0 0
        %1543 = vmatprep.subr.bf16.mxu0 0
        %1544 = vmatpush1.bf16.msra.mxu0 0
        %1545 = vmatprep.subr.bf16.mxu0 0
        %1546 = vmatpush1.bf16.msra.mxu0 0
        %1547 = vmatprep.subr.bf16.mxu0 0
        %1548 = vmatpush1.bf16.msra.mxu0 0
        %1549 = vmatprep.subr.bf16.mxu0 0
        %1550 = vmatpush1.bf16.msra.mxu0 0
        %1551 = vmatprep.subr.bf16.mxu0 0
        %1552 = vmatpush1.bf16.msra.mxu0 0
        %1553 = vmatprep.subr.bf16.mxu0 0
        %1554 = vmatpush1.bf16.msra.mxu0 %v1537
        %1555 = vmatprep.subr.bf16.mxu0 0
        %1556 = vmatpush2.bf16.msra.mxu0 0
        %1557 = vmatprep.subr.bf16.mxu0 0
        %1558 = vmatpush2.bf16.msra.mxu0 0
        %1559 = vmatprep.subr.bf16.mxu0 0
        %1560 = vmatpush2.bf16.msra.mxu0 0
        %1561 = vmatprep.subr.bf16.mxu0 0
        %1562 = vmatpush2.bf16.msra.mxu0 0
        %1563 = vmatprep.subr.bf16.mxu0 0
        %1564 = vmatpush2.bf16.msra.mxu0 0
        %1565 = vmatprep.subr.bf16.mxu0 0
        %1566 = vmatpush2.bf16.msra.mxu0 0
        %1567 = vmatprep.subr.bf16.mxu0 0
        %1568 = vmatpush2.bf16.msra.mxu0 0
        %1569 = vmatprep.subr.bf16.mxu0 0
        %1570 = vmatpush2.bf16.msra.mxu0 0
        %1571 = vmatprep.mubr.bf16.mxu0 0
        %1572 = vmatmul.mubr.bf16.gmra.mxu0 %v1534
        %v1573 = vpop.f32.mrf.mxu0
        %v1574 = vadd.f32 0.0, %v1573
        %v1575 = vpop.f32.mrf.mxu0
        %v1576 = vpop.f32.mrf.mxu0
        %v1577 = vpop.f32.mrf.mxu0
        %1578 = vdwg.mxu0
        %1580 = vrot.lane.b32.xlu0 %v1470, 120
        %v1581 = vpop.permute.xlu0 %1580
        %1583 = vrot.lane.b32.xlu0 %v1471, 120
        %v1584 = vpop.permute.xlu0 %1583
        %v1586 = vsel %vm820, %v1581, 0
        %v1589 = vsel %vm820, %v1584, 0
        %1591 = vmatprep.subr.bf16.mxu0 0
        %1592 = vmatpush1.bf16.xpose.msra.mxu0 0
        %1593 = vmatprep.subr.bf16.mxu0 0
        %1594 = vmatpush1.bf16.xpose.msra.mxu0 0
        %1595 = vmatprep.subr.bf16.mxu0 0
        %1596 = vmatpush1.bf16.xpose.msra.mxu0 0
        %1597 = vmatprep.subr.bf16.mxu0 0
        %1598 = vmatpush1.bf16.xpose.msra.mxu0 0
        %1599 = vmatprep.subr.bf16.mxu0 0
        %1600 = vmatpush1.bf16.xpose.msra.mxu0 0
        %1601 = vmatprep.subr.bf16.mxu0 0
        %1602 = vmatpush1.bf16.xpose.msra.mxu0 0
        %1603 = vmatprep.subr.bf16.mxu0 0
        %1604 = vmatpush1.bf16.xpose.msra.mxu0 0
        %1605 = vmatprep.subr.bf16.mxu0 0
        %1606 = vmatpush1.bf16.xpose.msra.mxu0 %v1589
        %1607 = vmatprep.subr.bf16.mxu0 0
        %1608 = vmatpush2.bf16.xpose.msra.mxu0 0
        %1609 = vmatprep.subr.bf16.mxu0 0
        %1610 = vmatpush2.bf16.xpose.msra.mxu0 0
        %1611 = vmatprep.subr.bf16.mxu0 0
        %1612 = vmatpush2.bf16.xpose.msra.mxu0 0
        %1613 = vmatprep.subr.bf16.mxu0 0
        %1614 = vmatpush2.bf16.xpose.msra.mxu0 0
        %1615 = vmatprep.subr.bf16.mxu0 0
        %1616 = vmatpush2.bf16.xpose.msra.mxu0 0
        %1617 = vmatprep.subr.bf16.mxu0 0
        %1618 = vmatpush2.bf16.xpose.msra.mxu0 0
        %1619 = vmatprep.subr.bf16.mxu0 0
        %1620 = vmatpush2.bf16.xpose.msra.mxu0 0
        %1621 = vmatprep.subr.bf16.mxu0 0
        %1622 = vmatpush2.bf16.xpose.msra.mxu0 0
        %1623 = vmatprep.mubr.bf16.mxu0 0
        %1624 = vmatmul.mubr.bf16.gmra.mxu0 %v1586
        %v1625 = vpop.f32.mrf.mxu0
        %v1626 = vadd.f32 0.0, %v1625
        %v1627 = vpop.f32.mrf.mxu0
        %v1628 = vpop.f32.mrf.mxu0
        %v1629 = vpop.f32.mrf.mxu0
        %1630 = vdwg.mxu0
        %v1631 = vsel %vm1289, %v1626, -9e+15
        %v1632 = vadd.f32 %v1631, %v1288
        %v1633 = vsel %vm820, %v1632, -inf
        %1634 = vmax.xlane.f32.xlu0 %v1633
        %v1635 = vpop.xlane.xlu0 %1634
        %v1636 = vsub.f32 %v1632, %v1635
        %v1637 = vmul.f32 %v1636, 1.442695
        %v1638 = vpow.pop %v1637
        %v1639 = vsel %vm820, %v1638, 0.0
        %1640 = vadd.xlane.f32.xlu0 %v1639
        %v1641 = vpop.xlane.xlu0 %1640
        %v1642 = vrcp.pop %v1641
        %v1643 = vmul.f32 %v1638, %v1642
        %v1644 = vpack.c.bf16 %v1643, %v1643
        %1646 = vrot.lane.b32.xlu0 %v1472, 120
        %v1647 = vpop.permute.xlu0 %1646
        %v1649 = vsel %vm820, %v1644, 0
        %v1652 = vsel %vm884, %v1647, 0
        %1654 = vmatprep.subr.bf16.mxu0 0
        %1655 = vmatpush1.bf16.msra.mxu0 0
        %1656 = vmatprep.subr.bf16.mxu0 0
        %1657 = vmatpush1.bf16.msra.mxu0 0
        %1658 = vmatprep.subr.bf16.mxu0 0
        %1659 = vmatpush1.bf16.msra.mxu0 0
        %1660 = vmatprep.subr.bf16.mxu0 0
        %1661 = vmatpush1.bf16.msra.mxu0 0
        %1662 = vmatprep.subr.bf16.mxu0 0
        %1663 = vmatpush1.bf16.msra.mxu0 0
        %1664 = vmatprep.subr.bf16.mxu0 0
        %1665 = vmatpush1.bf16.msra.mxu0 0
        %1666 = vmatprep.subr.bf16.mxu0 0
        %1667 = vmatpush1.bf16.msra.mxu0 0
        %1668 = vmatprep.subr.bf16.mxu0 0
        %1669 = vmatpush1.bf16.msra.mxu0 %v1652
        %1670 = vmatprep.subr.bf16.mxu0 0
        %1671 = vmatpush2.bf16.msra.mxu0 0
        %1672 = vmatprep.subr.bf16.mxu0 0
        %1673 = vmatpush2.bf16.msra.mxu0 0
        %1674 = vmatprep.subr.bf16.mxu0 0
        %1675 = vmatpush2.bf16.msra.mxu0 0
        %1676 = vmatprep.subr.bf16.mxu0 0
        %1677 = vmatpush2.bf16.msra.mxu0 0
        %1678 = vmatprep.subr.bf16.mxu0 0
        %1679 = vmatpush2.bf16.msra.mxu0 0
        %1680 = vmatprep.subr.bf16.mxu0 0
        %1681 = vmatpush2.bf16.msra.mxu0 0
        %1682 = vmatprep.subr.bf16.mxu0 0
        %1683 = vmatpush2.bf16.msra.mxu0 0
        %1684 = vmatprep.subr.bf16.mxu0 0
        %1685 = vmatpush2.bf16.msra.mxu0 0
        %1686 = vmatprep.mubr.bf16.mxu0 0
        %1687 = vmatmul.mubr.bf16.gmra.mxu0 %v1649
        %v1688 = vpop.f32.mrf.mxu0
        %v1689 = vadd.f32 0.0, %v1688
        %v1690 = vpop.f32.mrf.mxu0
        %v1691 = vpop.f32.mrf.mxu0
        %v1692 = vpop.f32.mrf.mxu0
        %1693 = vdwg.mxu0
        %1694 = vrot.lane.b32.xlu0 %v1470, 112
        %v1695 = vpop.permute.xlu0 %1694
        %1696 = vrot.lane.b32.xlu0 %v1471, 112
        %v1697 = vpop.permute.xlu0 %1696
        %v1699 = vsel %vm820, %v1695, 0
        %v1702 = vsel %vm820, %v1697, 0
        %1704 = vmatprep.subr.bf16.mxu0 0
        %1705 = vmatpush1.bf16.xpose.msra.mxu0 0
        %1706 = vmatprep.subr.bf16.mxu0 0
        %1707 = vmatpush1.bf16.xpose.msra.mxu0 0
        %1708 = vmatprep.subr.bf16.mxu0 0
        %1709 = vmatpush1.bf16.xpose.msra.mxu0 0
        %1710 = vmatprep.subr.bf16.mxu0 0
        %1711 = vmatpush1.bf16.xpose.msra.mxu0 0
        %1712 = vmatprep.subr.bf16.mxu0 0
        %1713 = vmatpush1.bf16.xpose.msra.mxu0 0
        %1714 = vmatprep.subr.bf16.mxu0 0
        %1715 = vmatpush1.bf16.xpose.msra.mxu0 0
        %1716 = vmatprep.subr.bf16.mxu0 0
        %1717 = vmatpush1.bf16.xpose.msra.mxu0 0
        %1718 = vmatprep.subr.bf16.mxu0 0
        %1719 = vmatpush1.bf16.xpose.msra.mxu0 %v1702
        %1720 = vmatprep.subr.bf16.mxu0 0
        %1721 = vmatpush2.bf16.xpose.msra.mxu0 0
        %1722 = vmatprep.subr.bf16.mxu0 0
        %1723 = vmatpush2.bf16.xpose.msra.mxu0 0
        %1724 = vmatprep.subr.bf16.mxu0 0
        %1725 = vmatpush2.bf16.xpose.msra.mxu0 0
        %1726 = vmatprep.subr.bf16.mxu0 0
        %1727 = vmatpush2.bf16.xpose.msra.mxu0 0
        %1728 = vmatprep.subr.bf16.mxu0 0
        %1729 = vmatpush2.bf16.xpose.msra.mxu0 0
        %1730 = vmatprep.subr.bf16.mxu0 0
        %1731 = vmatpush2.bf16.xpose.msra.mxu0 0
        %1732 = vmatprep.subr.bf16.mxu0 0
        %1733 = vmatpush2.bf16.xpose.msra.mxu0 0
        %1734 = vmatprep.subr.bf16.mxu0 0
        %1735 = vmatpush2.bf16.xpose.msra.mxu0 0
        %1736 = vmatprep.mubr.bf16.mxu0 0
        %1737 = vmatmul.mubr.bf16.gmra.mxu0 %v1699
        %v1738 = vpop.f32.mrf.mxu0
        %v1739 = vadd.f32 0.0, %v1738
        %v1740 = vpop.f32.mrf.mxu0
        %v1741 = vpop.f32.mrf.mxu0
        %v1742 = vpop.f32.mrf.mxu0
        %1743 = vdwg.mxu0
        %v1744 = vsel %vm1289, %v1739, -9e+15
        %v1745 = vadd.f32 %v1744, %v1288
        %v1746 = vsel %vm820, %v1745, -inf
        %1747 = vmax.xlane.f32.xlu0 %v1746
        %v1748 = vpop.xlane.xlu0 %1747
        %v1749 = vsub.f32 %v1745, %v1748
        %v1750 = vmul.f32 %v1749, 1.442695
        %v1751 = vpow.pop %v1750
        %v1752 = vsel %vm820, %v1751, 0.0
        %1753 = vadd.xlane.f32.xlu0 %v1752
        %v1754 = vpop.xlane.xlu0 %1753
        %v1755 = vrcp.pop %v1754
        %v1756 = vmul.f32 %v1751, %v1755
        %v1757 = vpack.c.bf16 %v1756, %v1756
        %1758 = vrot.lane.b32.xlu0 %v1472, 112
        %v1759 = vpop.permute.xlu0 %1758
        %v1761 = vsel %vm820, %v1757, 0
        %v1764 = vsel %vm884, %v1759, 0
        %1766 = vmatprep.subr.bf16.mxu0 0
        %1767 = vmatpush1.bf16.msra.mxu0 0
        %1768 = vmatprep.subr.bf16.mxu0 0
        %1769 = vmatpush1.bf16.msra.mxu0 0
        %1770 = vmatprep.subr.bf16.mxu0 0
        %1771 = vmatpush1.bf16.msra.mxu0 0
        %1772 = vmatprep.subr.bf16.mxu0 0
        %1773 = vmatpush1.bf16.msra.mxu0 0
        %1774 = vmatprep.subr.bf16.mxu0 0
        %1775 = vmatpush1.bf16.msra.mxu0 0
        %1776 = vmatprep.subr.bf16.mxu0 0
        %1777 = vmatpush1.bf16.msra.mxu0 0
        %1778 = vmatprep.subr.bf16.mxu0 0
        %1779 = vmatpush1.bf16.msra.mxu0 0
        %1780 = vmatprep.subr.bf16.mxu0 0
        %1781 = vmatpush1.bf16.msra.mxu0 %v1764
        %1782 = vmatprep.subr.bf16.mxu0 0
        %1783 = vmatpush2.bf16.msra.mxu0 0
        %1784 = vmatprep.subr.bf16.mxu0 0
        %1785 = vmatpush2.bf16.msra.mxu0 0
        %1786 = vmatprep.subr.bf16.mxu0 0
        %1787 = vmatpush2.bf16.msra.mxu0 0
        %1788 = vmatprep.subr.bf16.mxu0 0
        %1789 = vmatpush2.bf16.msra.mxu0 0
        %1790 = vmatprep.subr.bf16.mxu0 0
        %1791 = vmatpush2.bf16.msra.mxu0 0
        %1792 = vmatprep.subr.bf16.mxu0 0
        %1793 = vmatpush2.bf16.msra.mxu0 0
        %1794 = vmatprep.subr.bf16.mxu0 0
        %1795 = vmatpush2.bf16.msra.mxu0 0
        %1796 = vmatprep.subr.bf16.mxu0 0
        %1797 = vmatpush2.bf16.msra.mxu0 0
        %1798 = vmatprep.mubr.bf16.mxu0 0
        %1799 = vmatmul.mubr.bf16.gmra.mxu0 %v1761
        %v1800 = vpop.f32.mrf.mxu0
        %v1801 = vadd.f32 0.0, %v1800
        %v1802 = vpop.f32.mrf.mxu0
        %v1803 = vpop.f32.mrf.mxu0
        %v1804 = vpop.f32.mrf.mxu0
        %1805 = vdwg.mxu0
        %1806 = vrot.lane.b32.xlu0 %v1470, 104
        %v1807 = vpop.permute.xlu0 %1806
        %1808 = vrot.lane.b32.xlu0 %v1471, 104
        %v1809 = vpop.permute.xlu0 %1808
        %v1811 = vsel %vm820, %v1807, 0
        %v1814 = vsel %vm820, %v1809, 0
        %1816 = vmatprep.subr.bf16.mxu0 0
        %1817 = vmatpush1.bf16.xpose.msra.mxu0 0
        %1818 = vmatprep.subr.bf16.mxu0 0
        %1819 = vmatpush1.bf16.xpose.msra.mxu0 0
        %1820 = vmatprep.subr.bf16.mxu0 0
        %1821 = vmatpush1.bf16.xpose.msra.mxu0 0
        %1822 = vmatprep.subr.bf16.mxu0 0
        %1823 = vmatpush1.bf16.xpose.msra.mxu0 0
        %1824 = vmatprep.subr.bf16.mxu0 0
        %1825 = vmatpush1.bf16.xpose.msra.mxu0 0
        %1826 = vmatprep.subr.bf16.mxu0 0
        %1827 = vmatpush1.bf16.xpose.msra.mxu0 0
        %1828 = vmatprep.subr.bf16.mxu0 0
        %1829 = vmatpush1.bf16.xpose.msra.mxu0 0
        %1830 = vmatprep.subr.bf16.mxu0 0
        %1831 = vmatpush1.bf16.xpose.msra.mxu0 %v1814
        %1832 = vmatprep.subr.bf16.mxu0 0
        %1833 = vmatpush2.bf16.xpose.msra.mxu0 0
        %1834 = vmatprep.subr.bf16.mxu0 0
        %1835 = vmatpush2.bf16.xpose.msra.mxu0 0
        %1836 = vmatprep.subr.bf16.mxu0 0
        %1837 = vmatpush2.bf16.xpose.msra.mxu0 0
        %1838 = vmatprep.subr.bf16.mxu0 0
        %1839 = vmatpush2.bf16.xpose.msra.mxu0 0
        %1840 = vmatprep.subr.bf16.mxu0 0
        %1841 = vmatpush2.bf16.xpose.msra.mxu0 0
        %1842 = vmatprep.subr.bf16.mxu0 0
        %1843 = vmatpush2.bf16.xpose.msra.mxu0 0
        %1844 = vmatprep.subr.bf16.mxu0 0
        %1845 = vmatpush2.bf16.xpose.msra.mxu0 0
        %1846 = vmatprep.subr.bf16.mxu0 0
        %1847 = vmatpush2.bf16.xpose.msra.mxu0 0
        %1848 = vmatprep.mubr.bf16.mxu0 0
        %1849 = vmatmul.mubr.bf16.gmra.mxu0 %v1811
        %v1850 = vpop.f32.mrf.mxu0
        %v1851 = vadd.f32 0.0, %v1850
        %v1852 = vpop.f32.mrf.mxu0
        %v1853 = vpop.f32.mrf.mxu0
        %v1854 = vpop.f32.mrf.mxu0
        %1855 = vdwg.mxu0
        %v1856 = vsel %vm1289, %v1851, -9e+15
        %v1857 = vadd.f32 %v1856, %v1288
        %v1858 = vsel %vm820, %v1857, -inf
        %1859 = vmax.xlane.f32.xlu0 %v1858
        %v1860 = vpop.xlane.xlu0 %1859
        %v1861 = vsub.f32 %v1857, %v1860
        %v1862 = vmul.f32 %v1861, 1.442695
        %v1863 = vpow.pop %v1862
        %v1864 = vsel %vm820, %v1863, 0.0
        %1865 = vadd.xlane.f32.xlu0 %v1864
        %v1866 = vpop.xlane.xlu0 %1865
        %v1867 = vrcp.pop %v1866
        %v1868 = vmul.f32 %v1863, %v1867
        %v1869 = vpack.c.bf16 %v1868, %v1868
        %1870 = vrot.lane.b32.xlu0 %v1472, 104
        %v1871 = vpop.permute.xlu0 %1870
        %v1873 = vsel %vm820, %v1869, 0
        %v1876 = vsel %vm884, %v1871, 0
        %1878 = vmatprep.subr.bf16.mxu0 0
        %1879 = vmatpush1.bf16.msra.mxu0 0
        %1880 = vmatprep.subr.bf16.mxu0 0
        %1881 = vmatpush1.bf16.msra.mxu0 0
        %1882 = vmatprep.subr.bf16.mxu0 0
        %1883 = vmatpush1.bf16.msra.mxu0 0
        %1884 = vmatprep.subr.bf16.mxu0 0
        %1885 = vmatpush1.bf16.msra.mxu0 0
        %1886 = vmatprep.subr.bf16.mxu0 0
        %1887 = vmatpush1.bf16.msra.mxu0 0
        %1888 = vmatprep.subr.bf16.mxu0 0
        %1889 = vmatpush1.bf16.msra.mxu0 0
        %1890 = vmatprep.subr.bf16.mxu0 0
        %1891 = vmatpush1.bf16.msra.mxu0 0
        %1892 = vmatprep.subr.bf16.mxu0 0
        %1893 = vmatpush1.bf16.msra.mxu0 %v1876
        %1894 = vmatprep.subr.bf16.mxu0 0
        %1895 = vmatpush2.bf16.msra.mxu0 0
        %1896 = vmatprep.subr.bf16.mxu0 0
        %1897 = vmatpush2.bf16.msra.mxu0 0
        %1898 = vmatprep.subr.bf16.mxu0 0
        %1899 = vmatpush2.bf16.msra.mxu0 0
        %1900 = vmatprep.subr.bf16.mxu0 0
        %1901 = vmatpush2.bf16.msra.mxu0 0
        %1902 = vmatprep.subr.bf16.mxu0 0
        %1903 = vmatpush2.bf16.msra.mxu0 0
        %1904 = vmatprep.subr.bf16.mxu0 0
        %1905 = vmatpush2.bf16.msra.mxu0 0
        %1906 = vmatprep.subr.bf16.mxu0 0
        %1907 = vmatpush2.bf16.msra.mxu0 0
        %1908 = vmatprep.subr.bf16.mxu0 0
        %1909 = vmatpush2.bf16.msra.mxu0 0
        %1910 = vmatprep.mubr.bf16.mxu0 0
        %1911 = vmatmul.mubr.bf16.gmra.mxu0 %v1873
        %v1912 = vpop.f32.mrf.mxu0
        %v1913 = vadd.f32 0.0, %v1912
        %v1914 = vpop.f32.mrf.mxu0
        %v1915 = vpop.f32.mrf.mxu0
        %v1916 = vpop.f32.mrf.mxu0
        %1917 = vdwg.mxu0
        %1919 = vrot.lane.b32.xlu0 %v1689, 8
        %v1920 = vpop.permute.xlu0 %1919
        %1923 = vrot.lane.b32.xlu0 %v1801, 16
        %v1924 = vpop.permute.xlu0 %1923
        %1927 = vrot.lane.b32.xlu0 %v1913, 24
        %v1928 = vpop.permute.xlu0 %1927
        %v1930 = vsel %vm820, %v1574, %v1920
        %v1931 = vsel %vm1280, %v1930, %v1924
        %v1932 = vsel %vm1282, %v1931, %v1928
        %v1933 = vadd.f32 %v1284, %v1932
        %vm1934 = vcmask 254976
        %v1935 = vsel %vm1934, %v630, 0.0
        %v1936 = vrot.slane %v1935, 4
        %v1937 = vadd.f32 %v1935, %v1936
        %v1938 = vrot.slane %v1937, 2
        %v1939 = vadd.f32 %v1937, %v1938
        %v1940 = vrot.slane %v1939, 1
        %v1941 = vadd.f32 %v1939, %v1940
        %v1942 = vadd.f32 %v1933, %v1941
        %v1943 = vmax.f32 %v1942, 0.0
        %1944 = vst.msk [vmem:[%s485] sm:$0xff] %vm538, %v1943
        %s1945 = sand.u32 %s326, 1
        %s1946 = scalar_lea.sflag [#allocation3], %s1945
        %s1947 = sand.u32 %s326, 1
        %s1948 = smul.addr %s1947, 8
        %s1949 = scalar_lea.vmem [#allocation2], %s1948
        // Predicated region
        $region69: #{gattnet_forward.1} parent=67 // pred_check
          %p1950 = pneg %p336
        $region70: #{gattnet_forward.1} parent=67 // pred_check_branch
          %1952 = sbr.rel (%p1950) target = $region72
        $region71: #{gattnet_forward.1} parent=67 // pred_region
          %s1954 = ssub.s32 128, 128
          %1955 = vsyncadd %s1946, %s1954
          %s1956 = sadd.s32 %s31, %s30
          %s1957 = smul.addr %s1956, 128
          %s1958 = scalar_lea.hbm %s12, %s1957
          %s1960 = sshll.u32 %s1949, 4
          %s1961 = int_to_ptr.vmem [resolvable:$true] %s1960
          %1963 = dma.vmem_to_hbm [thread:$0]  %s1961, 128, %s1958, %s1946
        $region72: #{gattnet_forward.1} parent=67 // pred_fallthru
          _
      $region68: #{gattnet_forward.1} parent=5 // pred_fallthru
        _
      %p1964 = scmp.le.s32.totalorder 2, %s21
      // Predicated region
      $region73: #{gattnet_forward.1} parent=5 // pred_check
        %p1965 = pneg %p1964
      $region74: #{gattnet_forward.1} parent=5 // pred_check_branch
        %1967 = sbr.rel (%p1965) target = $region76
      $region75: #{gattnet_forward.1} parent=5 // pred_region
        %s1968 = ssub.s32 %s21, 2
        // Predicated region
        $region77: #{gattnet_forward.1} parent=75 // pred_check
          %p1969 = pneg %p342
        $region78: #{gattnet_forward.1} parent=75 // pred_check_branch
          %1971 = sbr.rel (%p1969) target = $region80
        $region79: #{gattnet_forward.1} parent=75 // pred_region
          %s1972 = sand.u32 %s327, 1
          %s1973 = scalar_lea.sflag [#allocation3], %s1972
          %s1974 = sand.u32 %s327, 1
          %s1975 = smul.addr %s1974, 8
          %s1976 = scalar_lea.vmem [#allocation2], %s1975
          %1977 = dma.done %s1973, 128
        $region80: #{gattnet_forward.1} parent=75 // pred_fallthru
          _
      $region76: #{gattnet_forward.1} parent=5 // pred_fallthru
        _
    $region6: #{gattnet_forward.1} parent=1 // loop_footer
      %s25 = sadd.s32 1, %s21
    $region7: #{gattnet_forward.1} parent=1 // loop_footer_branch
      %20 = sbr.rel target = $region3
    $region8: #{gattnet_forward.1} parent=1 // loop_exit
      _
    %1978 = vsyncpa [#allocation3], 1
    %s1979 = scalar_lea.sflag [#allocation3], 1
    %1980 = vsyncpa %s1979, 1

</llo_original>
